<compile_context>
chip_gen: v7x
topology: tpu7x:2x2x1
jax: 0.10.0
libtpu: 0.0.40
codegen_flags: <defaults>
</compile_context>

<pallas_src>
import functools

import jax
import jax.numpy as jnp
from jax.experimental import pallas as pl
from jax.experimental.pallas import tpu as pltpu

INPUT_DIM = 5
IN_PAD = 8       # sublane-aligned padded input width
HIDDEN = 512
OUTPUT_DIM = 3
OUT_PAD = 128    # lane-dense padded output width (multiple of 128)


def _round_up(n, m):
    return (n + m - 1) // m * m


def _probe_single_buffer():
    """Check once whether pipeline_mode=pl.Buffered(1) compiles & runs here."""
    if not hasattr(pl, "Buffered"):
        return False
    try:
        def _copy(x_ref, o_ref):
            o_ref[...] = x_ref[...]

        spec = pl.BlockSpec((8, 128), lambda i: (0, 0),
                            pipeline_mode=pl.Buffered(1))
        out = pl.pallas_call(
            _copy,
            out_shape=jax.ShapeDtypeStruct((8, 128), jnp.float32),
            grid=(1,),
            in_specs=[spec],
            out_specs=pl.BlockSpec((8, 128), lambda i: (0, 0)),
        )(jnp.zeros((8, 128), jnp.float32))
        jax.block_until_ready(out)
        return True
    except Exception:  # pragma: no cover - fall back to default double-buffer
        return False


_SINGLE_BUFFER_WEIGHTS = _probe_single_buffer()


def _mlp_kernel(x_ref, w1_ref, b1_ref, w2_ref, b2_ref, w3_ref, b3_ref,
                w4_ref, b4_ref, o_ref, *, use_bf16):
    def mm(a, w_ref):
        # Weights arrive already in their final dtype (pre-cast in wrapper).
        if use_bf16:
            a = a.astype(jnp.bfloat16)  # small (TM, K) cast only
        return jnp.dot(a, w_ref[...], preferred_element_type=jnp.float32)

    x = x_ref[...]
    h = jnp.maximum(mm(x, w1_ref) + b1_ref[...], 0.0)
    h = jnp.maximum(mm(h, w2_ref) + b2_ref[...], 0.0)
    h = jnp.maximum(mm(h, w3_ref) + b3_ref[...], 0.0)
    # Lane-dense (TM, 128) store; columns beyond OUTPUT_DIM are zero-padded
    # weights/bias and are sliced away in the wrapper.
    o_ref[...] = (mm(h, w4_ref) + b4_ref[...]).astype(o_ref.dtype)


def _resident_spec(a):
    """Full-array block with a constant index_map: stays in VMEM all grid steps."""
    ndim = a.ndim
    index_map = lambda i: (0,) * ndim  # noqa: E731
    if _SINGLE_BUFFER_WEIGHTS:
        return pl.BlockSpec(a.shape, index_map, pipeline_mode=pl.Buffered(1))
    return pl.BlockSpec(a.shape, index_map)


@functools.partial(jax.jit, static_argnames=("use_bf16_matmul",))
def simple_net_forward(x, params, use_bf16_matmul=False):
    """Run the SimpleNet forward pass in one Pallas kernel.

    x: (B, INPUT_DIM) float32
    params: dict with w1..w4 (in, out) and b1..b4 (1, out) float32 arrays.
    """
    B = x.shape[0]
    if B >= 256:
        TM = 256          # native MXU M tile on v6e/v7x; even tile counts
    elif B >= 128:
        TM = 128
    else:
        TM = _round_up(max(B, 1), 8)
    B_pad = _round_up(B, TM)
    num_tiles = B_pad // TM

    # Pad batch rows and the degenerate K=5 input dim to sublane-aligned 8.
    x_p = jnp.pad(x, ((0, B_pad - B), (0, IN_PAD - INPUT_DIM)))

    w1 = jnp.pad(params["w1"], ((0, IN_PAD - INPUT_DIM), (0, 0)))
    w4 = jnp.pad(params["w4"], ((0, 0), (0, OUT_PAD - OUTPUT_DIM)))
    b4 = jnp.pad(params["b4"], ((0, 0), (0, OUT_PAD - OUTPUT_DIM)))

    # Pre-cast weights in the wrapper (review item 1); biases stay f32 since
    # they are added to the f32 accumulator.
    w_dtype = jnp.bfloat16 if use_bf16_matmul else jnp.float32
    weight_args = (w1.astype(w_dtype), params["b1"],
                   params["w2"].astype(w_dtype), params["b2"],
                   params["w3"].astype(w_dtype), params["b3"],
                   w4.astype(w_dtype), b4)

    flops = 2 * B_pad * (IN_PAD * HIDDEN
                         + HIDDEN * HIDDEN * 2
                         + HIDDEN * OUT_PAD)
    bytes_accessed = (sum(int(a.size) * a.dtype.itemsize for a in weight_args)
                      + B_pad * IN_PAD * 4 + B_pad * OUT_PAD * 4)

    out = pl.pallas_call(
        functools.partial(_mlp_kernel, use_bf16=use_bf16_matmul),
        out_shape=jax.ShapeDtypeStruct((B_pad, OUT_PAD), jnp.float32),
        grid=(num_tiles,),
        in_specs=[pl.BlockSpec((TM, IN_PAD), lambda i: (i, 0))]
                 + [_resident_spec(a) for a in weight_args],
        out_specs=pl.BlockSpec((TM, OUT_PAD), lambda i: (i, 0)),
        compiler_params=pltpu.CompilerParams(
            dimension_semantics=("parallel",),
            vmem_limit_bytes=32 << 20),
        cost_estimate=pl.CostEstimate(
            flops=flops, transcendentals=0, bytes_accessed=bytes_accessed),
    )(x_p, *weight_args)

    return out[:B, :OUTPUT_DIM]


def init_params(key):
    """Deterministic init mimicking PyTorch nn.Linear default (U(-1/sqrt(fan_in), +))."""
    dims = [(INPUT_DIM, HIDDEN), (HIDDEN, HIDDEN), (HIDDEN, HIDDEN),
            (HIDDEN, OUTPUT_DIM)]
    params = {}
    for i, (fan_in, fan_out) in enumerate(dims, start=1):
        key, kw, kb = jax.random.split(key, 3)
        bound = 1.0 / jnp.sqrt(jnp.float32(fan_in))
        # Stored as (in, out) == transpose of PyTorch's (out, in) weight.
        params[f"w{i}"] = jax.random.uniform(
            kw, (fan_in, fan_out), jnp.float32, -bound, bound)
        params[f"b{i}"] = jax.random.uniform(
            kb, (1, fan_out), jnp.float32, -bound, bound)
    return params


def reference_forward(x, params):
    """Pure-JAX reference for correctness checking."""
    h = jnp.maximum(x @ params["w1"] + params["b1"], 0.0)
    h = jnp.maximum(h @ params["w2"] + params["b2"], 0.0)
    h = jnp.maximum(h @ params["w3"] + params["b3"], 0.0)
    return h @ params["w4"] + params["b4"]


if __name__ == "__main__":
    key = jax.random.PRNGKey(0)
    key, kx1, kx2 = jax.random.split(key, 3)
    params = init_params(key)

    # Small batch (matches the MAML few-shot use-case): single grid step.
    batch = 8
    x = jax.random.normal(kx1, (batch, INPUT_DIM), jnp.float32)
    out = jax.block_until_ready(simple_net_forward(x, params))
    ref = reference_forward(x, params)
    assert out.shape == (batch, OUTPUT_DIM), out.shape
    assert jnp.allclose(out, ref, atol=1e-4, rtol=1e-4), "mismatch vs reference (B=8)"

    # Larger, non-divisible batch: exercises TM=256, even 2-tile grid,
    # batch/row padding and the output slice.
    batch2 = 300
    x2 = jax.random.normal(kx2, (batch2, INPUT_DIM), jnp.float32)
    out2 = jax.block_until_ready(simple_net_forward(x2, params))
    ref2 = reference_forward(x2, params)
    assert out2.shape == (batch2, OUTPUT_DIM), out2.shape
    assert jnp.allclose(out2, ref2, atol=1e-4, rtol=1e-4), "mismatch vs reference (B=300)"

    # bf16 MXU path (weights pre-cast once in the wrapper, f32 accumulation).
    # Looser tolerance: bf16 inputs over 512-long dots give O(1e-3) rel error.
    out_bf16 = jax.block_until_ready(
        simple_net_forward(x2, params, use_bf16_matmul=True))
    assert out_bf16.shape == (batch2, OUTPUT_DIM), out_bf16.shape
    assert jnp.allclose(out_bf16, ref2, atol=5e-2, rtol=5e-2), \
        "mismatch vs reference (bf16 path)"

    print("KERNEL_OK")
</pallas_src>

<mosaic_0001>
module attributes {stable_mosaic.version = 11 : i64} {
  func.func @_copy(%arg0: i32, %arg1: memref<8x128xf32, #tpu.memory_space<vmem>>, %arg2: memref<8x128xf32, #tpu.memory_space<vmem>>) attributes {dimension_semantics = [#tpu.dimension_semantics<arbitrary>], iteration_bounds = array<i64: 1>, scalar_prefetch = 0 : i64, scratch_operands = 0 : i64, tpu.core_type = #tpu.core_type<tc>, window_params = [{pipeline_mode = #tpu.pipeline_mode<synchronous>, transform_indices = @transform_0, window_bounds = array<i64: 8, 128>}, {pipeline_mode = #tpu.pipeline_mode<synchronous>, transform_indices = @transform_1, window_bounds = array<i64: 8, 128>}]} {
    %c0 = arith.constant 0 : index
    %c0_0 = arith.constant 0 : index
    %0 = vector.load %arg1[%c0, %c0_0] : memref<8x128xf32, #tpu.memory_space<vmem>>, vector<8x128xf32>
    %c0_1 = arith.constant 0 : index
    %c0_2 = arith.constant 0 : index
    %1 = vector.load %arg2[%c0_1, %c0_2] : memref<8x128xf32, #tpu.memory_space<vmem>>, vector<8x128xf32>
    tpu.vector_store %arg2[%c0_1, %c0_2], %0 {strides = array<i32>} : memref<8x128xf32, #tpu.memory_space<vmem>>, vector<8x128xf32>,
    return
  }
  func.func @transform_0(%arg0: i32) -> (i32, i32) {
    %c0_i32 = arith.constant 0 : i32
    %c0_i32_0 = arith.constant 0 : i32
    %c0_i32_1 = arith.constant 0 : i32
    return %c0_i32, %c0_i32_0 : i32, i32
  }
  func.func @transform_1(%arg0: i32) -> (i32, i32) {
    %c0_i32 = arith.constant 0 : i32
    %c0_i32_0 = arith.constant 0 : i32
    %c0_i32_1 = arith.constant 0 : i32
    return %c0_i32, %c0_i32_0 : i32, i32
  }
}

module attributes {stable_mosaic.version = 11 : i64} {
  func.func @_mlp_kernel(%arg0: i32, %arg1: memref<8x8xf32, #tpu.memory_space<vmem>>, %arg2: memref<8x512xf32, #tpu.memory_space<vmem>>, %arg3: memref<1x512xf32, #tpu.memory_space<vmem>>, %arg4: memref<512x512xf32, #tpu.memory_space<vmem>>, %arg5: memref<1x512xf32, #tpu.memory_space<vmem>>, %arg6: memref<512x512xf32, #tpu.memory_space<vmem>>, %arg7: memref<1x512xf32, #tpu.memory_space<vmem>>, %arg8: memref<512x128xf32, #tpu.memory_space<vmem>>, %arg9: memref<1x128xf32, #tpu.memory_space<vmem>>, %arg10: memref<8x128xf32, #tpu.memory_space<vmem>>) attributes {dimension_semantics = [#tpu.dimension_semantics<parallel>], iteration_bounds = array<i64: 1>, scalar_prefetch = 0 : i64, scratch_operands = 0 : i64, tpu.core_type = #tpu.core_type<tc>, window_params = [{transform_indices = @transform_0, window_bounds = array<i64: 8, 8>}, {pipeline_mode = #tpu.pipeline_mode<synchronous>, transform_indices = @transform_1, window_bounds = array<i64: 8, 512>}, {pipeline_mode = #tpu.pipeline_mode<synchronous>, transform_indices = @transform_2, window_bounds = array<i64: 1, 512>}, {pipeline_mode = #tpu.pipeline_mode<synchronous>, transform_indices = @transform_3, window_bounds = array<i64: 512, 512>}, {pipeline_mode = #tpu.pipeline_mode<synchronous>, transform_indices = @transform_4, window_bounds = array<i64: 1, 512>}, {pipeline_mode = #tpu.pipeline_mode<synchronous>, transform_indices = @transform_5, window_bounds = array<i64: 512, 512>}, {pipeline_mode = #tpu.pipeline_mode<synchronous>, transform_indices = @transform_6, window_bounds = array<i64: 1, 512>}, {pipeline_mode = #tpu.pipeline_mode<synchronous>, transform_indices = @transform_7, window_bounds = array<i64: 512, 128>}, {pipeline_mode = #tpu.pipeline_mode<synchronous>, transform_indices = @transform_8, window_bounds = array<i64: 1, 128>}, {transform_indices = @transform_9, window_bounds = array<i64: 8, 128>}]} {
    %c0 = arith.constant 0 : index
    %c0_0 = arith.constant 0 : index
    %0 = vector.load %arg1[%c0, %c0_0] : memref<8x8xf32, #tpu.memory_space<vmem>>, vector<8x8xf32>
    %c0_1 = arith.constant 0 : index
    %c0_2 = arith.constant 0 : index
    %1 = vector.load %arg2[%c0_1, %c0_2] : memref<8x512xf32, #tpu.memory_space<vmem>>, vector<8x512xf32>
    %cst = arith.constant dense<0.000000e+00> : vector<8x512xf32>
    %2 = tpu.matmul %0, %1, %cst {dimension_numbers = #tpu.dot_dimension_numbers<[1], [0], [0], [1], [0, 0, 1, 1], [], []>} : vector<8x8xf32>, vector<8x512xf32>, vector<8x512xf32> -> vector<8x512xf32>
    %c0_3 = arith.constant 0 : index
    %c0_4 = arith.constant 0 : index
    %3 = vector.load %arg3[%c0_3, %c0_4] : memref<1x512xf32, #tpu.memory_space<vmem>>, vector<1x512xf32>
    %4 = vector.broadcast %3 : vector<1x512xf32> to vector<8x512xf32>
    %5 = arith.addf %2, %4 : vector<8x512xf32>
    %cst_5 = arith.constant 0.000000e+00 : f32
    %6 = vector.broadcast %cst_5 : f32 to vector<8x512xf32>
    %7 = arith.maximumf %5, %6 : vector<8x512xf32>
    %c0_6 = arith.constant 0 : index
    %c0_7 = arith.constant 0 : index
    %8 = vector.load %arg4[%c0_6, %c0_7] : memref<512x512xf32, #tpu.memory_space<vmem>>, vector<512x512xf32>
    %cst_8 = arith.constant dense<0.000000e+00> : vector<8x512xf32>
    %9 = tpu.matmul %7, %8, %cst_8 {dimension_numbers = #tpu.dot_dimension_numbers<[1], [0], [0], [1], [0, 0, 1, 1], [], []>} : vector<8x512xf32>, vector<512x512xf32>, vector<8x512xf32> -> vector<8x512xf32>
    %c0_9 = arith.constant 0 : index
    %c0_10 = arith.constant 0 : index
    %10 = vector.load %arg5[%c0_9, %c0_10] : memref<1x512xf32, #tpu.memory_space<vmem>>, vector<1x512xf32>
    %11 = vector.broadcast %10 : vector<1x512xf32> to vector<8x512xf32>
    %12 = arith.addf %9, %11 : vector<8x512xf32>
    %cst_11 = arith.constant 0.000000e+00 : f32
    %13 = vector.broadcast %cst_11 : f32 to vector<8x512xf32>
    %14 = arith.maximumf %12, %13 : vector<8x512xf32>
    %c0_12 = arith.constant 0 : index
    %c0_13 = arith.constant 0 : index
    %15 = vector.load %arg6[%c0_12, %c0_13] : memref<512x512xf32, #tpu.memory_space<vmem>>, vector<512x512xf32>
    %cst_14 = arith.constant dense<0.000000e+00> : vector<8x512xf32>
    %16 = tpu.matmul %14, %15, %cst_14 {dimension_numbers = #tpu.dot_dimension_numbers<[1], [0], [0], [1], [0, 0, 1, 1], [], []>} : vector<8x512xf32>, vector<512x512xf32>, vector<8x512xf32> -> vector<8x512xf32>
    %c0_15 = arith.constant 0 : index
    %c0_16 = arith.constant 0 : index
    %17 = vector.load %arg7[%c0_15, %c0_16] : memref<1x512xf32, #tpu.memory_space<vmem>>, vector<1x512xf32>
    %18 = vector.broadcast %17 : vector<1x512xf32> to vector<8x512xf32>
    %19 = arith.addf %16, %18 : vector<8x512xf32>
    %cst_17 = arith.constant 0.000000e+00 : f32
    %20 = vector.broadcast %cst_17 : f32 to vector<8x512xf32>
    %21 = arith.maximumf %19, %20 : vector<8x512xf32>
    %c0_18 = arith.constant 0 : index
    %c0_19 = arith.constant 0 : index
    %22 = vector.load %arg8[%c0_18, %c0_19] : memref<512x128xf32, #tpu.memory_space<vmem>>, vector<512x128xf32>
    %cst_20 = arith.constant dense<0.000000e+00> : vector<8x128xf32>
    %23 = tpu.matmul %21, %22, %cst_20 {dimension_numbers = #tpu.dot_dimension_numbers<[1], [0], [0], [1], [0, 0, 1, 1], [], []>} : vector<8x512xf32>, vector<512x128xf32>, vector<8x128xf32> -> vector<8x128xf32>
    %c0_21 = arith.constant 0 : index
    %c0_22 = arith.constant 0 : index
    %24 = vector.load %arg9[%c0_21, %c0_22] : memref<1x128xf32, #tpu.memory_space<vmem>>, vector<1x128xf32>
    %25 = vector.broadcast %24 : vector<1x128xf32> to vector<8x128xf32>
    %26 = arith.addf %23, %25 : vector<8x128xf32>
    %c0_23 = arith.constant 0 : index
    %c0_24 = arith.constant 0 : index
    %27 = vector.load %arg10[%c0_23, %c0_24] : memref<8x128xf32, #tpu.memory_space<vmem>>, vector<8x128xf32>
    tpu.vector_store %arg10[%c0_23, %c0_24], %26 {strides = array<i32>} : memref<8x128xf32, #tpu.memory_space<vmem>>, vector<8x128xf32>,
    return
  }
  func.func @transform_0(%arg0: i32) -> (i32, i32) {
    %c0_i32 = arith.constant 0 : i32
    %c0_i32_0 = arith.constant 0 : i32
    return %arg0, %c0_i32 : i32, i32
  }
  func.func @transform_1(%arg0: i32) -> (i32, i32) {
    %c0_i32 = arith.constant 0 : i32
    %c0_i32_0 = arith.constant 0 : i32
    %c0_i32_1 = arith.constant 0 : i32
    return %c0_i32, %c0_i32_0 : i32, i32
  }
  func.func @transform_2(%arg0: i32) -> (i32, i32) {
    %c0_i32 = arith.constant 0 : i32
    %c0_i32_0 = arith.constant 0 : i32
    %c0_i32_1 = arith.constant 0 : i32
    return %c0_i32, %c0_i32_0 : i32, i32
  }
  func.func @transform_3(%arg0: i32) -> (i32, i32) {
    %c0_i32 = arith.constant 0 : i32
    %c0_i32_0 = arith.constant 0 : i32
    %c0_i32_1 = arith.constant 0 : i32
    return %c0_i32, %c0_i32_0 : i32, i32
  }
  func.func @transform_4(%arg0: i32) -> (i32, i32) {
    %c0_i32 = arith.constant 0 : i32
    %c0_i32_0 = arith.constant 0 : i32
    %c0_i32_1 = arith.constant 0 : i32
    return %c0_i32, %c0_i32_0 : i32, i32
  }
  func.func @transform_5(%arg0: i32) -> (i32, i32) {
    %c0_i32 = arith.constant 0 : i32
    %c0_i32_0 = arith.constant 0 : i32
    %c0_i32_1 = arith.constant 0 : i32
    return %c0_i32, %c0_i32_0 : i32, i32
  }
  func.func @transform_6(%arg0: i32) -> (i32, i32) {
    %c0_i32 = arith.constant 0 : i32
    %c0_i32_0 = arith.constant 0 : i32
    %c0_i32_1 = arith.constant 0 : i32
    return %c0_i32, %c0_i32_0 : i32, i32
  }
  func.func @transform_7(%arg0: i32) -> (i32, i32) {
    %c0_i32 = arith.constant 0 : i32
    %c0_i32_0 = arith.constant 0 : i32
    %c0_i32_1 = arith.constant 0 : i32
    return %c0_i32, %c0_i32_0 : i32, i32
  }
  func.func @transform_8(%arg0: i32) -> (i32, i32) {
    %c0_i32 = arith.constant 0 : i32
    %c0_i32_0 = arith.constant 0 : i32
    %c0_i32_1 = arith.constant 0 : i32
    return %c0_i32, %c0_i32_0 : i32, i32
  }
  func.func @transform_9(%arg0: i32) -> (i32, i32) {
    %c0_i32 = arith.constant 0 : i32
    %c0_i32_0 = arith.constant 0 : i32
    return %arg0, %c0_i32 : i32, i32
  }
}

</mosaic_0001>

<llo_original>
// kernel: tpu_custom_call.1
$region0: #{tpu_custom_call.1}
  #allocation0 [shape = 'u32[]', space=smem, size = 0x4, offset = 0x4, fixed_abs, tag = 'smem constant byte address 0x4 - core index']
  #allocation1 [shape = 'u32[144,128]{1,0:T(1,128)}', space=vmem, size = 0x12000, scoped, tag = 'internal scratch']
  %s0 = inlined_call_operand.hbm [shape: f32[8,128], index: 0, kind: input, shape index: {}]
  %s1 = inlined_call_operand.hbm [shape: f32[8,128], index: 1, kind: output, shape index: {}]
  %s2 = sld [smem:[#allocation0]]
  $region18: #{tpu_custom_call.1} parent=0
    _
  %s4 = ssub.s32 1, %s2
  %s5 = scalar_select 0, %s4, %s2
  $region1: #{tpu_custom_call.1} parent=0
    #allocation2 [shape = 'u8[4096]{0}', space=vmem, size = 0x1000, scoped, tag = 'input window, operand 0, single buffered']
    #allocation3 [shape = 's32[1]{0}', space=sflag, size = 0x4, scoped, tag = 'scoped memory for tpu_custom_call.1']
    #allocation4 [shape = 's32[1]{0}', space=sflag, size = 0x4, scoped, tag = 'scoped memory for tpu_custom_call.1']
    #allocation5 [shape = 'u8[4096]{0}', space=vmem, size = 0x1000, scoped, tag = 'output window, operand 0, single buffered']
    %6 = vsyncpa [#allocation3], 0
    %7 = vsyncpa [#allocation4], 0
    // Predicated region
    $region2: #{tpu_custom_call.1} parent=1 // pred_check
      _
    $region3: #{tpu_custom_call.1} parent=1 // pred_check_branch
      %9 = sbr.rel (0) target = $region5
    $region4: #{tpu_custom_call.1} parent=1 // pred_region
      %s11 = ssub.s32 128, 128
      %12 = vsyncadd [#allocation3], %s11
      %s14 = sshll.u32 [#allocation2], 4
      %s15 = int_to_ptr.vmem [resolvable:$true] %s14
      %17 = dma.hbm_to_vmem [thread:$0]  %s0, 128, %s15, [#allocation3]
    $region5: #{tpu_custom_call.1} parent=1 // pred_fallthru
      _
    // Predicated region
    $region6: #{tpu_custom_call.1} parent=1 // pred_check
      _
    $region7: #{tpu_custom_call.1} parent=1 // pred_check_branch
      %19 = sbr.rel (0) target = $region9
    $region8: #{tpu_custom_call.1} parent=1 // pred_region
      %20 = dma.done [#allocation3], 128
    $region9: #{tpu_custom_call.1} parent=1 // pred_fallthru
      _
    %v21 = vld [vmem:[#allocation2] sm:$0xff]
    %22 = vst [vmem:[#allocation5] sm:$0xff] %v21
    // Predicated region
    $region10: #{tpu_custom_call.1} parent=1 // pred_check
      _
    $region11: #{tpu_custom_call.1} parent=1 // pred_check_branch
      %24 = sbr.rel (0) target = $region13
    $region12: #{tpu_custom_call.1} parent=1 // pred_region
      %s26 = ssub.s32 128, 128
      %27 = vsyncadd [#allocation4], %s26
      %s29 = sshll.u32 [#allocation5], 4
      %s30 = int_to_ptr.vmem [resolvable:$true] %s29
      %32 = dma.vmem_to_hbm [thread:$0]  %s30, 128, %s1, [#allocation4]
    $region13: #{tpu_custom_call.1} parent=1 // pred_fallthru
      _
    // Predicated region
    $region14: #{tpu_custom_call.1} parent=1 // pred_check
      _
    $region15: #{tpu_custom_call.1} parent=1 // pred_check_branch
      %34 = sbr.rel (0) target = $region17
    $region16: #{tpu_custom_call.1} parent=1 // pred_region
      %35 = dma.done [#allocation4], 128
    $region17: #{tpu_custom_call.1} parent=1 // pred_fallthru
      _
    %36 = vsyncpa [#allocation3], 1
    %37 = vsyncpa [#allocation4], 1

// kernel: simple_net_forward.1
$region0: #{simple_net_forward.1}
  #allocation0 [shape = 'u32[]', space=smem, size = 0x4, offset = 0x4, fixed_abs, tag = 'smem constant byte address 0x4 - core index']
  #allocation1 [shape = 'u32[144,128]{1,0:T(1,128)}', space=vmem, size = 0x12000, scoped, tag = 'internal scratch']
  %s0 = inlined_call_operand.vmem [shape: f32[8,8], index: 0, kind: input, shape index: {}]
  %s1 = inlined_call_operand.vmem [shape: f32[8,512], index: 1, kind: input, shape index: {}]
  %s2 = inlined_call_operand.vmem [shape: f32[1,512], index: 2, kind: input, shape index: {}]
  %s3 = inlined_call_operand.hbm [shape: f32[512,512], index: 3, kind: input, shape index: {}]
  %s4 = inlined_call_operand.vmem [shape: f32[1,512], index: 4, kind: input, shape index: {}]
  %s5 = inlined_call_operand.hbm [shape: f32[512,512], index: 5, kind: input, shape index: {}]
  %s6 = inlined_call_operand.vmem [shape: f32[1,512], index: 6, kind: input, shape index: {}]
  %s7 = inlined_call_operand.vmem [shape: f32[512,128], index: 7, kind: input, shape index: {}]
  %s8 = inlined_call_operand.vmem [shape: f32[1,128], index: 8, kind: input, shape index: {}]
  %s9 = inlined_call_operand.vmem [shape: f32[8,128], index: 9, kind: output, shape index: {}]
  %s10 = sld [smem:[#allocation0]]
  $region54: #{simple_net_forward.1} parent=0
    _
  %s12 = ssub.s32 1, %s10
  %s13 = scalar_select 0, %s12, %s10
  $region1: #{simple_net_forward.1} parent=0
    #allocation2 [shape = 'u8[1048576]{0}', space=vmem, size = 0x100000, scoped, tag = 'input window, operand 3, single buffered']
    #allocation3 [shape = 's32[1]{0}', space=sflag, size = 0x4, scoped, tag = 'scoped memory for simple_net_forward.1']
    #allocation4 [shape = 'u8[1048576]{0}', space=vmem, size = 0x100000, scoped, tag = 'input window, operand 5, single buffered']
    #allocation5 [shape = 's32[1]{0}', space=sflag, size = 0x4, scoped, tag = 'scoped memory for simple_net_forward.1']
    %14 = vsyncpa [#allocation3], 0
    %15 = vsyncpa [#allocation5], 0
    // Predicated region
    $region2: #{simple_net_forward.1} parent=1 // pred_check
      _
    $region3: #{simple_net_forward.1} parent=1 // pred_check_branch
      %17 = sbr.rel (0) target = $region5
    $region4: #{simple_net_forward.1} parent=1 // pred_region
      _
    $region5: #{simple_net_forward.1} parent=1 // pred_fallthru
      _
    // Predicated region
    $region6: #{simple_net_forward.1} parent=1 // pred_check
      _
    $region7: #{simple_net_forward.1} parent=1 // pred_check_branch
      %19 = sbr.rel (0) target = $region9
    $region8: #{simple_net_forward.1} parent=1 // pred_region
      _
    $region9: #{simple_net_forward.1} parent=1 // pred_fallthru
      _
    // Predicated region
    $region10: #{simple_net_forward.1} parent=1 // pred_check
      _
    $region11: #{simple_net_forward.1} parent=1 // pred_check_branch
      %21 = sbr.rel (0) target = $region13
    $region12: #{simple_net_forward.1} parent=1 // pred_region
      _
    $region13: #{simple_net_forward.1} parent=1 // pred_fallthru
      _
    // Predicated region
    $region14: #{simple_net_forward.1} parent=1 // pred_check
      _
    $region15: #{simple_net_forward.1} parent=1 // pred_check_branch
      %23 = sbr.rel (0) target = $region17
    $region16: #{simple_net_forward.1} parent=1 // pred_region
      %s25 = ssub.s32 32768, 32768
      %26 = vsyncadd [#allocation3], %s25
      %s27 = sshll.u32 [#allocation2], 4
      %s28 = int_to_ptr.vmem [resolvable:$true] %s27
      %33 = dma.hbm_to_vmem [thread:$0]  %s3, 32768, %s28, [#allocation3], 512, 512, 32
    $region17: #{simple_net_forward.1} parent=1 // pred_fallthru
      _
    // Predicated region
    $region18: #{simple_net_forward.1} parent=1 // pred_check
      _
    $region19: #{simple_net_forward.1} parent=1 // pred_check_branch
      %35 = sbr.rel (0) target = $region21
    $region20: #{simple_net_forward.1} parent=1 // pred_region
      _
    $region21: #{simple_net_forward.1} parent=1 // pred_fallthru
      _
    // Predicated region
    $region22: #{simple_net_forward.1} parent=1 // pred_check
      _
    $region23: #{simple_net_forward.1} parent=1 // pred_check_branch
      %37 = sbr.rel (0) target = $region25
    $region24: #{simple_net_forward.1} parent=1 // pred_region
      %s39 = ssub.s32 32768, 32768
      %40 = vsyncadd [#allocation5], %s39
      %s41 = sshll.u32 [#allocation4], 4
      %s42 = int_to_ptr.vmem [resolvable:$true] %s41
      %47 = dma.hbm_to_vmem [thread:$0]  %s5, 32768, %s42, [#allocation5], 512, 512, 32
    $region25: #{simple_net_forward.1} parent=1 // pred_fallthru
      _
    // Predicated region
    $region26: #{simple_net_forward.1} parent=1 // pred_check
      _
    $region27: #{simple_net_forward.1} parent=1 // pred_check_branch
      %49 = sbr.rel (0) target = $region29
    $region28: #{simple_net_forward.1} parent=1 // pred_region
      _
    $region29: #{simple_net_forward.1} parent=1 // pred_fallthru
      _
    // Predicated region
    $region30: #{simple_net_forward.1} parent=1 // pred_check
      _
    $region31: #{simple_net_forward.1} parent=1 // pred_check_branch
      %51 = sbr.rel (0) target = $region33
    $region32: #{simple_net_forward.1} parent=1 // pred_region
      _
    $region33: #{simple_net_forward.1} parent=1 // pred_fallthru
      _
    // Predicated region
    $region34: #{simple_net_forward.1} parent=1 // pred_check
      _
    $region35: #{simple_net_forward.1} parent=1 // pred_check_branch
      %53 = sbr.rel (0) target = $region37
    $region36: #{simple_net_forward.1} parent=1 // pred_region
      _
    $region37: #{simple_net_forward.1} parent=1 // pred_fallthru
      _
    // Predicated region
    $region38: #{simple_net_forward.1} parent=1 // pred_check
      _
    $region39: #{simple_net_forward.1} parent=1 // pred_check_branch
      %55 = sbr.rel (0) target = $region41
    $region40: #{simple_net_forward.1} parent=1 // pred_region
      %56 = dma.done [#allocation3], 32768
    $region41: #{simple_net_forward.1} parent=1 // pred_fallthru
      _
    // Predicated region
    $region42: #{simple_net_forward.1} parent=1 // pred_check
      _
    $region43: #{simple_net_forward.1} parent=1 // pred_check_branch
      %58 = sbr.rel (0) target = $region45
    $region44: #{simple_net_forward.1} parent=1 // pred_region
      %59 = dma.done [#allocation5], 32768
    $region45: #{simple_net_forward.1} parent=1 // pred_fallthru
      _
    %v60 = vld [vmem:[%s0] sm:$0xff]
    %v61 = vld [vmem:[%s1] sm:$0xff]
    %v62 = vld [vmem:[%s1 + $0x8] sm:$0xff]
    %v63 = vld [vmem:[%s1 + $0x10] sm:$0xff]
    %v64 = vld [vmem:[%s1 + $0x18] sm:$0xff]
    %v65 = vld [vmem:[%s2] sm:$0xf]
    %v67 = vlaneseq
    %v68 = vshrl.u32 %v67, 7
    %v69 = vsub.s32 0, %v68
    %v70 = vrot.slane %v65, %v69
    %v71 = vlaneseq
    %v72 = vshrl.u32 %v71, 7
    %v73 = vsub.s32 1, %v72
    %v74 = vrot.slane %v65, %v73
    %v75 = vlaneseq
    %v76 = vshrl.u32 %v75, 7
    %v77 = vsub.s32 2, %v76
    %v78 = vrot.slane %v65, %v77
    %v79 = vlaneseq
    %v80 = vshrl.u32 %v79, 7
    %v81 = vsub.s32 3, %v80
    %v82 = vrot.slane %v65, %v81
    %vm87 = vcmask 64512
    %v89 = vsel %vm87, %v60, 0
    %91 = vmatprep.subr.mxu0 %v62
    %92 = vmatpush1.msra.mxu0 %v61
    %93 = vmatprep.subr.mxu0 0.0
    %94 = vmatpush1.msra.mxu0 0.0
    %95 = vmatprep.subr.mxu0 0.0
    %96 = vmatpush1.msra.mxu0 0.0
    %97 = vmatprep.subr.mxu0 0.0
    %98 = vmatpush1.msra.mxu0 0.0
    %99 = vmatprep.subr.mxu0 0.0
    %100 = vmatpush1.msra.mxu0 0.0
    %101 = vmatprep.subr.mxu0 0.0
    %102 = vmatpush1.msra.mxu0 0.0
    %103 = vmatprep.subr.mxu0 0.0
    %104 = vmatpush1.msra.mxu0 0.0
    %105 = vmatprep.subr.mxu0 0.0
    %106 = vmatpush1.msra.mxu0 0.0
    %107 = vmatprep.subr.mxu0 0.0
    %108 = vmatpush1.msra.mxu0 0.0
    %109 = vmatprep.subr.mxu0 0.0
    %110 = vmatpush1.msra.mxu0 0.0
    %111 = vmatprep.subr.mxu0 0.0
    %112 = vmatpush1.msra.mxu0 0.0
    %113 = vmatprep.subr.mxu0 0.0
    %114 = vmatpush1.msra.mxu0 0.0
    %115 = vmatprep.subr.mxu0 0.0
    %116 = vmatpush1.msra.mxu0 0.0
    %117 = vmatprep.subr.mxu0 0.0
    %118 = vmatpush1.msra.mxu0 0.0
    %119 = vmatprep.subr.mxu0 0.0
    %120 = vmatpush1.msra.mxu0 0.0
    %121 = vmatprep.subr.mxu0 0.0
    %122 = vmatpush1.msra.mxu0 0.0
    %123 = vmatprep.subr.mxu0 0.0
    %124 = vmatpush1.msra.mxu0 0.0
    %125 = vmatprep.subr.mxu0 0.0
    %126 = vmatpush1.msra.mxu0 0.0
    %127 = vmatprep.subr.mxu0 0.0
    %128 = vmatpush1.msra.mxu0 0.0
    %129 = vmatprep.subr.mxu0 0.0
    %130 = vmatpush1.msra.mxu0 0.0
    %131 = vmatprep.subr.mxu0 0.0
    %132 = vmatpush1.msra.mxu0 0.0
    %133 = vmatprep.subr.mxu0 0.0
    %134 = vmatpush1.msra.mxu0 0.0
    %135 = vmatprep.subr.mxu0 0.0
    %136 = vmatpush1.msra.mxu0 0.0
    %137 = vmatprep.subr.mxu0 0.0
    %138 = vmatpush1.msra.mxu0 0.0
    %139 = vmatprep.subr.mxu0 0.0
    %140 = vmatpush1.msra.mxu0 0.0
    %141 = vmatprep.subr.mxu0 0.0
    %142 = vmatpush1.msra.mxu0 0.0
    %143 = vmatprep.subr.mxu0 0.0
    %144 = vmatpush1.msra.mxu0 0.0
    %145 = vmatprep.subr.mxu0 0.0
    %146 = vmatpush1.msra.mxu0 0.0
    %147 = vmatprep.subr.mxu0 0.0
    %148 = vmatpush1.msra.mxu0 0.0
    %149 = vmatprep.subr.mxu0 0.0
    %150 = vmatpush1.msra.mxu0 0.0
    %151 = vmatprep.subr.mxu0 0.0
    %152 = vmatpush1.msra.mxu0 0.0
    %153 = vmatprep.subr.mxu0 0.0
    %154 = vmatpush1.msra.mxu0 0.0
    %155 = vmatprep.mubr.f32.mxu0 0.0
    %156 = vmatmul.mubr.f32.gmra.mrb[0].mxu0 %v89
    %v157 = vpop.f32.mrb[0].mxu0
    %v158 = vadd.f32 %v70, %v157
    %v159 = vpop.f32.mrb[0].mxu0
    %v160 = vadd.f32 %v74, %v159
    %161 = vdwg.mxu0
    %162 = vmatprep.subr.mxu0 %v64
    %163 = vmatpush1.msra.mxu0 %v63
    %164 = vmatprep.subr.mxu0 0.0
    %165 = vmatpush1.msra.mxu0 0.0
    %166 = vmatprep.subr.mxu0 0.0
    %167 = vmatpush1.msra.mxu0 0.0
    %168 = vmatprep.subr.mxu0 0.0
    %169 = vmatpush1.msra.mxu0 0.0
    %170 = vmatprep.subr.mxu0 0.0
    %171 = vmatpush1.msra.mxu0 0.0
    %172 = vmatprep.subr.mxu0 0.0
    %173 = vmatpush1.msra.mxu0 0.0
    %174 = vmatprep.subr.mxu0 0.0
    %175 = vmatpush1.msra.mxu0 0.0
    %176 = vmatprep.subr.mxu0 0.0
    %177 = vmatpush1.msra.mxu0 0.0
    %178 = vmatprep.subr.mxu0 0.0
    %179 = vmatpush1.msra.mxu0 0.0
    %180 = vmatprep.subr.mxu0 0.0
    %181 = vmatpush1.msra.mxu0 0.0
    %182 = vmatprep.subr.mxu0 0.0
    %183 = vmatpush1.msra.mxu0 0.0
    %184 = vmatprep.subr.mxu0 0.0
    %185 = vmatpush1.msra.mxu0 0.0
    %186 = vmatprep.subr.mxu0 0.0
    %187 = vmatpush1.msra.mxu0 0.0
    %188 = vmatprep.subr.mxu0 0.0
    %189 = vmatpush1.msra.mxu0 0.0
    %190 = vmatprep.subr.mxu0 0.0
    %191 = vmatpush1.msra.mxu0 0.0
    %192 = vmatprep.subr.mxu0 0.0
    %193 = vmatpush1.msra.mxu0 0.0
    %194 = vmatprep.subr.mxu0 0.0
    %195 = vmatpush1.msra.mxu0 0.0
    %196 = vmatprep.subr.mxu0 0.0
    %197 = vmatpush1.msra.mxu0 0.0
    %198 = vmatprep.subr.mxu0 0.0
    %199 = vmatpush1.msra.mxu0 0.0
    %200 = vmatprep.subr.mxu0 0.0
    %201 = vmatpush1.msra.mxu0 0.0
    %202 = vmatprep.subr.mxu0 0.0
    %203 = vmatpush1.msra.mxu0 0.0
    %204 = vmatprep.subr.mxu0 0.0
    %205 = vmatpush1.msra.mxu0 0.0
    %206 = vmatprep.subr.mxu0 0.0
    %207 = vmatpush1.msra.mxu0 0.0
    %208 = vmatprep.subr.mxu0 0.0
    %209 = vmatpush1.msra.mxu0 0.0
    %210 = vmatprep.subr.mxu0 0.0
    %211 = vmatpush1.msra.mxu0 0.0
    %212 = vmatprep.subr.mxu0 0.0
    %213 = vmatpush1.msra.mxu0 0.0
    %214 = vmatprep.subr.mxu0 0.0
    %215 = vmatpush1.msra.mxu0 0.0
    %216 = vmatprep.subr.mxu0 0.0
    %217 = vmatpush1.msra.mxu0 0.0
    %218 = vmatprep.subr.mxu0 0.0
    %219 = vmatpush1.msra.mxu0 0.0
    %220 = vmatprep.subr.mxu0 0.0
    %221 = vmatpush1.msra.mxu0 0.0
    %222 = vmatprep.subr.mxu0 0.0
    %223 = vmatpush1.msra.mxu0 0.0
    %224 = vmatprep.subr.mxu0 0.0
    %225 = vmatpush1.msra.mxu0 0.0
    %226 = vmatprep.mubr.f32.mxu0 0.0
    %227 = vmatmul.mubr.f32.gmra.mrb[0].mxu0 %v89
    %v228 = vpop.f32.mrb[0].mxu0
    %v229 = vadd.f32 %v78, %v228
    %v230 = vpop.f32.mrb[0].mxu0
    %v231 = vadd.f32 %v82, %v230
    %232 = vdwg.mxu0
    %v233 = vmax.f32 %v158, 0.0
    %v234 = vmax.f32 %v160, 0.0
    %v235 = vmax.f32 %v229, 0.0
    %v236 = vmax.f32 %v231, 0.0
    %v237 = vld [vmem:[#allocation2] sm:$0xff]
    %v238 = vld [vmem:[#allocation2 + $0x8] sm:$0xff]
    %v239 = vld [vmem:[#allocation2 + $0x10] sm:$0xff]
    %v240 = vld [vmem:[#allocation2 + $0x18] sm:$0xff]
    %v241 = vld [vmem:[#allocation2 + $0x20] sm:$0xff]
    %v242 = vld [vmem:[#allocation2 + $0x28] sm:$0xff]
    %v243 = vld [vmem:[#allocation2 + $0x30] sm:$0xff]
    %v244 = vld [vmem:[#allocation2 + $0x38] sm:$0xff]
    %v245 = vld [vmem:[#allocation2 + $0x40] sm:$0xff]
    %v246 = vld [vmem:[#allocation2 + $0x48] sm:$0xff]
    %v247 = vld [vmem:[#allocation2 + $0x50] sm:$0xff]
    %v248 = vld [vmem:[#allocation2 + $0x58] sm:$0xff]
    %v249 = vld [vmem:[#allocation2 + $0x60] sm:$0xff]
    %v250 = vld [vmem:[#allocation2 + $0x68] sm:$0xff]
    %v251 = vld [vmem:[#allocation2 + $0x70] sm:$0xff]
    %v252 = vld [vmem:[#allocation2 + $0x78] sm:$0xff]
    %v253 = vld [vmem:[#allocation2 + $0x80] sm:$0xff]
    %v254 = vld [vmem:[#allocation2 + $0x88] sm:$0xff]
    %v255 = vld [vmem:[#allocation2 + $0x90] sm:$0xff]
    %v256 = vld [vmem:[#allocation2 + $0x98] sm:$0xff]
    %v257 = vld [vmem:[#allocation2 + $0xa0] sm:$0xff]
    %v258 = vld [vmem:[#allocation2 + $0xa8] sm:$0xff]
    %v259 = vld [vmem:[#allocation2 + $0xb0] sm:$0xff]
    %v260 = vld [vmem:[#allocation2 + $0xb8] sm:$0xff]
    %v261 = vld [vmem:[#allocation2 + $0xc0] sm:$0xff]
    %v262 = vld [vmem:[#allocation2 + $0xc8] sm:$0xff]
    %v263 = vld [vmem:[#allocation2 + $0xd0] sm:$0xff]
    %v264 = vld [vmem:[#allocation2 + $0xd8] sm:$0xff]
    %v265 = vld [vmem:[#allocation2 + $0xe0] sm:$0xff]
    %v266 = vld [vmem:[#allocation2 + $0xe8] sm:$0xff]
    %v267 = vld [vmem:[#allocation2 + $0xf0] sm:$0xff]
    %v268 = vld [vmem:[#allocation2 + $0xf8] sm:$0xff]
    %v269 = vld [vmem:[#allocation2 + $0x100] sm:$0xff]
    %v270 = vld [vmem:[#allocation2 + $0x108] sm:$0xff]
    %v271 = vld [vmem:[#allocation2 + $0x110] sm:$0xff]
    %v272 = vld [vmem:[#allocation2 + $0x118] sm:$0xff]
    %v273 = vld [vmem:[#allocation2 + $0x120] sm:$0xff]
    %v274 = vld [vmem:[#allocation2 + $0x128] sm:$0xff]
    %v275 = vld [vmem:[#allocation2 + $0x130] sm:$0xff]
    %v276 = vld [vmem:[#allocation2 + $0x138] sm:$0xff]
    %v277 = vld [vmem:[#allocation2 + $0x140] sm:$0xff]
    %v278 = vld [vmem:[#allocation2 + $0x148] sm:$0xff]
    %v279 = vld [vmem:[#allocation2 + $0x150] sm:$0xff]
    %v280 = vld [vmem:[#allocation2 + $0x158] sm:$0xff]
    %v281 = vld [vmem:[#allocation2 + $0x160] sm:$0xff]
    %v282 = vld [vmem:[#allocation2 + $0x168] sm:$0xff]
    %v283 = vld [vmem:[#allocation2 + $0x170] sm:$0xff]
    %v284 = vld [vmem:[#allocation2 + $0x178] sm:$0xff]
    %v285 = vld [vmem:[#allocation2 + $0x180] sm:$0xff]
    %v286 = vld [vmem:[#allocation2 + $0x188] sm:$0xff]
    %v287 = vld [vmem:[#allocation2 + $0x190] sm:$0xff]
    %v288 = vld [vmem:[#allocation2 + $0x198] sm:$0xff]
    %v289 = vld [vmem:[#allocation2 + $0x1a0] sm:$0xff]
    %v290 = vld [vmem:[#allocation2 + $0x1a8] sm:$0xff]
    %v291 = vld [vmem:[#allocation2 + $0x1b0] sm:$0xff]
    %v292 = vld [vmem:[#allocation2 + $0x1b8] sm:$0xff]
    %v293 = vld [vmem:[#allocation2 + $0x1c0] sm:$0xff]
    %v294 = vld [vmem:[#allocation2 + $0x1c8] sm:$0xff]
    %v295 = vld [vmem:[#allocation2 + $0x1d0] sm:$0xff]
    %v296 = vld [vmem:[#allocation2 + $0x1d8] sm:$0xff]
    %v297 = vld [vmem:[#allocation2 + $0x1e0] sm:$0xff]
    %v298 = vld [vmem:[#allocation2 + $0x1e8] sm:$0xff]
    %v299 = vld [vmem:[#allocation2 + $0x1f0] sm:$0xff]
    %v300 = vld [vmem:[#allocation2 + $0x1f8] sm:$0xff]
    %v301 = vld [vmem:[#allocation2 + $0x200] sm:$0xff]
    %v302 = vld [vmem:[#allocation2 + $0x208] sm:$0xff]
    %v303 = vld [vmem:[#allocation2 + $0x210] sm:$0xff]
    %v304 = vld [vmem:[#allocation2 + $0x218] sm:$0xff]
    %v305 = vld [vmem:[#allocation2 + $0x220] sm:$0xff]
    %v306 = vld [vmem:[#allocation2 + $0x228] sm:$0xff]
    %v307 = vld [vmem:[#allocation2 + $0x230] sm:$0xff]
    %v308 = vld [vmem:[#allocation2 + $0x238] sm:$0xff]
    %v309 = vld [vmem:[#allocation2 + $0x240] sm:$0xff]
    %v310 = vld [vmem:[#allocation2 + $0x248] sm:$0xff]
    %v311 = vld [vmem:[#allocation2 + $0x250] sm:$0xff]
    %v312 = vld [vmem:[#allocation2 + $0x258] sm:$0xff]
    %v313 = vld [vmem:[#allocation2 + $0x260] sm:$0xff]
    %v314 = vld [vmem:[#allocation2 + $0x268] sm:$0xff]
    %v315 = vld [vmem:[#allocation2 + $0x270] sm:$0xff]
    %v316 = vld [vmem:[#allocation2 + $0x278] sm:$0xff]
    %v317 = vld [vmem:[#allocation2 + $0x280] sm:$0xff]
    %v318 = vld [vmem:[#allocation2 + $0x288] sm:$0xff]
    %v319 = vld [vmem:[#allocation2 + $0x290] sm:$0xff]
    %v320 = vld [vmem:[#allocation2 + $0x298] sm:$0xff]
    %v321 = vld [vmem:[#allocation2 + $0x2a0] sm:$0xff]
    %v322 = vld [vmem:[#allocation2 + $0x2a8] sm:$0xff]
    %v323 = vld [vmem:[#allocation2 + $0x2b0] sm:$0xff]
    %v324 = vld [vmem:[#allocation2 + $0x2b8] sm:$0xff]
    %v325 = vld [vmem:[#allocation2 + $0x2c0] sm:$0xff]
    %v326 = vld [vmem:[#allocation2 + $0x2c8] sm:$0xff]
    %v327 = vld [vmem:[#allocation2 + $0x2d0] sm:$0xff]
    %v328 = vld [vmem:[#allocation2 + $0x2d8] sm:$0xff]
    %v329 = vld [vmem:[#allocation2 + $0x2e0] sm:$0xff]
    %v330 = vld [vmem:[#allocation2 + $0x2e8] sm:$0xff]
    %v331 = vld [vmem:[#allocation2 + $0x2f0] sm:$0xff]
    %v332 = vld [vmem:[#allocation2 + $0x2f8] sm:$0xff]
    %v333 = vld [vmem:[#allocation2 + $0x300] sm:$0xff]
    %v334 = vld [vmem:[#allocation2 + $0x308] sm:$0xff]
    %v335 = vld [vmem:[#allocation2 + $0x310] sm:$0xff]
    %v336 = vld [vmem:[#allocation2 + $0x318] sm:$0xff]
    %v337 = vld [vmem:[#allocation2 + $0x320] sm:$0xff]
    %v338 = vld [vmem:[#allocation2 + $0x328] sm:$0xff]
    %v339 = vld [vmem:[#allocation2 + $0x330] sm:$0xff]
    %v340 = vld [vmem:[#allocation2 + $0x338] sm:$0xff]
    %v341 = vld [vmem:[#allocation2 + $0x340] sm:$0xff]
    %v342 = vld [vmem:[#allocation2 + $0x348] sm:$0xff]
    %v343 = vld [vmem:[#allocation2 + $0x350] sm:$0xff]
    %v344 = vld [vmem:[#allocation2 + $0x358] sm:$0xff]
    %v345 = vld [vmem:[#allocation2 + $0x360] sm:$0xff]
    %v346 = vld [vmem:[#allocation2 + $0x368] sm:$0xff]
    %v347 = vld [vmem:[#allocation2 + $0x370] sm:$0xff]
    %v348 = vld [vmem:[#allocation2 + $0x378] sm:$0xff]
    %v349 = vld [vmem:[#allocation2 + $0x380] sm:$0xff]
    %v350 = vld [vmem:[#allocation2 + $0x388] sm:$0xff]
    %v351 = vld [vmem:[#allocation2 + $0x390] sm:$0xff]
    %v352 = vld [vmem:[#allocation2 + $0x398] sm:$0xff]
    %v353 = vld [vmem:[#allocation2 + $0x3a0] sm:$0xff]
    %v354 = vld [vmem:[#allocation2 + $0x3a8] sm:$0xff]
    %v355 = vld [vmem:[#allocation2 + $0x3b0] sm:$0xff]
    %v356 = vld [vmem:[#allocation2 + $0x3b8] sm:$0xff]
    %v357 = vld [vmem:[#allocation2 + $0x3c0] sm:$0xff]
    %v358 = vld [vmem:[#allocation2 + $0x3c8] sm:$0xff]
    %v359 = vld [vmem:[#allocation2 + $0x3d0] sm:$0xff]
    %v360 = vld [vmem:[#allocation2 + $0x3d8] sm:$0xff]
    %v361 = vld [vmem:[#allocation2 + $0x3e0] sm:$0xff]
    %v362 = vld [vmem:[#allocation2 + $0x3e8] sm:$0xff]
    %v363 = vld [vmem:[#allocation2 + $0x3f0] sm:$0xff]
    %v364 = vld [vmem:[#allocation2 + $0x3f8] sm:$0xff]
    %v365 = vld [vmem:[#allocation2 + $0x400] sm:$0xff]
    %v366 = vld [vmem:[#allocation2 + $0x408] sm:$0xff]
    %v367 = vld [vmem:[#allocation2 + $0x410] sm:$0xff]
    %v368 = vld [vmem:[#allocation2 + $0x418] sm:$0xff]
    %v369 = vld [vmem:[#allocation2 + $0x420] sm:$0xff]
    %v370 = vld [vmem:[#allocation2 + $0x428] sm:$0xff]
    %v371 = vld [vmem:[#allocation2 + $0x430] sm:$0xff]
    %v372 = vld [vmem:[#allocation2 + $0x438] sm:$0xff]
    %v373 = vld [vmem:[#allocation2 + $0x440] sm:$0xff]
    %v374 = vld [vmem:[#allocation2 + $0x448] sm:$0xff]
    %v375 = vld [vmem:[#allocation2 + $0x450] sm:$0xff]
    %v376 = vld [vmem:[#allocation2 + $0x458] sm:$0xff]
    %v377 = vld [vmem:[#allocation2 + $0x460] sm:$0xff]
    %v378 = vld [vmem:[#allocation2 + $0x468] sm:$0xff]
    %v379 = vld [vmem:[#allocation2 + $0x470] sm:$0xff]
    %v380 = vld [vmem:[#allocation2 + $0x478] sm:$0xff]
    %v381 = vld [vmem:[#allocation2 + $0x480] sm:$0xff]
    %v382 = vld [vmem:[#allocation2 + $0x488] sm:$0xff]
    %v383 = vld [vmem:[#allocation2 + $0x490] sm:$0xff]
    %v384 = vld [vmem:[#allocation2 + $0x498] sm:$0xff]
    %v385 = vld [vmem:[#allocation2 + $0x4a0] sm:$0xff]
    %v386 = vld [vmem:[#allocation2 + $0x4a8] sm:$0xff]
    %v387 = vld [vmem:[#allocation2 + $0x4b0] sm:$0xff]
    %v388 = vld [vmem:[#allocation2 + $0x4b8] sm:$0xff]
    %v389 = vld [vmem:[#allocation2 + $0x4c0] sm:$0xff]
    %v390 = vld [vmem:[#allocation2 + $0x4c8] sm:$0xff]
    %v391 = vld [vmem:[#allocation2 + $0x4d0] sm:$0xff]
    %v392 = vld [vmem:[#allocation2 + $0x4d8] sm:$0xff]
    %v393 = vld [vmem:[#allocation2 + $0x4e0] sm:$0xff]
    %v394 = vld [vmem:[#allocation2 + $0x4e8] sm:$0xff]
    %v395 = vld [vmem:[#allocation2 + $0x4f0] sm:$0xff]
    %v396 = vld [vmem:[#allocation2 + $0x4f8] sm:$0xff]
    %v397 = vld [vmem:[#allocation2 + $0x500] sm:$0xff]
    %v398 = vld [vmem:[#allocation2 + $0x508] sm:$0xff]
    %v399 = vld [vmem:[#allocation2 + $0x510] sm:$0xff]
    %v400 = vld [vmem:[#allocation2 + $0x518] sm:$0xff]
    %v401 = vld [vmem:[#allocation2 + $0x520] sm:$0xff]
    %v402 = vld [vmem:[#allocation2 + $0x528] sm:$0xff]
    %v403 = vld [vmem:[#allocation2 + $0x530] sm:$0xff]
    %v404 = vld [vmem:[#allocation2 + $0x538] sm:$0xff]
    %v405 = vld [vmem:[#allocation2 + $0x540] sm:$0xff]
    %v406 = vld [vmem:[#allocation2 + $0x548] sm:$0xff]
    %v407 = vld [vmem:[#allocation2 + $0x550] sm:$0xff]
    %v408 = vld [vmem:[#allocation2 + $0x558] sm:$0xff]
    %v409 = vld [vmem:[#allocation2 + $0x560] sm:$0xff]
    %v410 = vld [vmem:[#allocation2 + $0x568] sm:$0xff]
    %v411 = vld [vmem:[#allocation2 + $0x570] sm:$0xff]
    %v412 = vld [vmem:[#allocation2 + $0x578] sm:$0xff]
    %v413 = vld [vmem:[#allocation2 + $0x580] sm:$0xff]
    %v414 = vld [vmem:[#allocation2 + $0x588] sm:$0xff]
    %v415 = vld [vmem:[#allocation2 + $0x590] sm:$0xff]
    %v416 = vld [vmem:[#allocation2 + $0x598] sm:$0xff]
    %v417 = vld [vmem:[#allocation2 + $0x5a0] sm:$0xff]
    %v418 = vld [vmem:[#allocation2 + $0x5a8] sm:$0xff]
    %v419 = vld [vmem:[#allocation2 + $0x5b0] sm:$0xff]
    %v420 = vld [vmem:[#allocation2 + $0x5b8] sm:$0xff]
    %v421 = vld [vmem:[#allocation2 + $0x5c0] sm:$0xff]
    %v422 = vld [vmem:[#allocation2 + $0x5c8] sm:$0xff]
    %v423 = vld [vmem:[#allocation2 + $0x5d0] sm:$0xff]
    %v424 = vld [vmem:[#allocation2 + $0x5d8] sm:$0xff]
    %v425 = vld [vmem:[#allocation2 + $0x5e0] sm:$0xff]
    %v426 = vld [vmem:[#allocation2 + $0x5e8] sm:$0xff]
    %v427 = vld [vmem:[#allocation2 + $0x5f0] sm:$0xff]
    %v428 = vld [vmem:[#allocation2 + $0x5f8] sm:$0xff]
    %v429 = vld [vmem:[#allocation2 + $0x600] sm:$0xff]
    %v430 = vld [vmem:[#allocation2 + $0x608] sm:$0xff]
    %v431 = vld [vmem:[#allocation2 + $0x610] sm:$0xff]
    %v432 = vld [vmem:[#allocation2 + $0x618] sm:$0xff]
    %v433 = vld [vmem:[#allocation2 + $0x620] sm:$0xff]
    %v434 = vld [vmem:[#allocation2 + $0x628] sm:$0xff]
    %v435 = vld [vmem:[#allocation2 + $0x630] sm:$0xff]
    %v436 = vld [vmem:[#allocation2 + $0x638] sm:$0xff]
    %v437 = vld [vmem:[#allocation2 + $0x640] sm:$0xff]
    %v438 = vld [vmem:[#allocation2 + $0x648] sm:$0xff]
    %v439 = vld [vmem:[#allocation2 + $0x650] sm:$0xff]
    %v440 = vld [vmem:[#allocation2 + $0x658] sm:$0xff]
    %v441 = vld [vmem:[#allocation2 + $0x660] sm:$0xff]
    %v442 = vld [vmem:[#allocation2 + $0x668] sm:$0xff]
    %v443 = vld [vmem:[#allocation2 + $0x670] sm:$0xff]
    %v444 = vld [vmem:[#allocation2 + $0x678] sm:$0xff]
    %v445 = vld [vmem:[#allocation2 + $0x680] sm:$0xff]
    %v446 = vld [vmem:[#allocation2 + $0x688] sm:$0xff]
    %v447 = vld [vmem:[#allocation2 + $0x690] sm:$0xff]
    %v448 = vld [vmem:[#allocation2 + $0x698] sm:$0xff]
    %v449 = vld [vmem:[#allocation2 + $0x6a0] sm:$0xff]
    %v450 = vld [vmem:[#allocation2 + $0x6a8] sm:$0xff]
    %v451 = vld [vmem:[#allocation2 + $0x6b0] sm:$0xff]
    %v452 = vld [vmem:[#allocation2 + $0x6b8] sm:$0xff]
    %v453 = vld [vmem:[#allocation2 + $0x6c0] sm:$0xff]
    %v454 = vld [vmem:[#allocation2 + $0x6c8] sm:$0xff]
    %v455 = vld [vmem:[#allocation2 + $0x6d0] sm:$0xff]
    %v456 = vld [vmem:[#allocation2 + $0x6d8] sm:$0xff]
    %v457 = vld [vmem:[#allocation2 + $0x6e0] sm:$0xff]
    %v458 = vld [vmem:[#allocation2 + $0x6e8] sm:$0xff]
    %v459 = vld [vmem:[#allocation2 + $0x6f0] sm:$0xff]
    %v460 = vld [vmem:[#allocation2 + $0x6f8] sm:$0xff]
    %v461 = vld [vmem:[#allocation2 + $0x700] sm:$0xff]
    %v462 = vld [vmem:[#allocation2 + $0x708] sm:$0xff]
    %v463 = vld [vmem:[#allocation2 + $0x710] sm:$0xff]
    %v464 = vld [vmem:[#allocation2 + $0x718] sm:$0xff]
    %v465 = vld [vmem:[#allocation2 + $0x720] sm:$0xff]
    %v466 = vld [vmem:[#allocation2 + $0x728] sm:$0xff]
    %v467 = vld [vmem:[#allocation2 + $0x730] sm:$0xff]
    %v468 = vld [vmem:[#allocation2 + $0x738] sm:$0xff]
    %v469 = vld [vmem:[#allocation2 + $0x740] sm:$0xff]
    %v470 = vld [vmem:[#allocation2 + $0x748] sm:$0xff]
    %v471 = vld [vmem:[#allocation2 + $0x750] sm:$0xff]
    %v472 = vld [vmem:[#allocation2 + $0x758] sm:$0xff]
    %v473 = vld [vmem:[#allocation2 + $0x760] sm:$0xff]
    %v474 = vld [vmem:[#allocation2 + $0x768] sm:$0xff]
    %v475 = vld [vmem:[#allocation2 + $0x770] sm:$0xff]
    %v476 = vld [vmem:[#allocation2 + $0x778] sm:$0xff]
    %v477 = vld [vmem:[#allocation2 + $0x780] sm:$0xff]
    %v478 = vld [vmem:[#allocation2 + $0x788] sm:$0xff]
    %v479 = vld [vmem:[#allocation2 + $0x790] sm:$0xff]
    %v480 = vld [vmem:[#allocation2 + $0x798] sm:$0xff]
    %v481 = vld [vmem:[#allocation2 + $0x7a0] sm:$0xff]
    %v482 = vld [vmem:[#allocation2 + $0x7a8] sm:$0xff]
    %v483 = vld [vmem:[#allocation2 + $0x7b0] sm:$0xff]
    %v484 = vld [vmem:[#allocation2 + $0x7b8] sm:$0xff]
    %v485 = vld [vmem:[#allocation2 + $0x7c0] sm:$0xff]
    %v486 = vld [vmem:[#allocation2 + $0x7c8] sm:$0xff]
    %v487 = vld [vmem:[#allocation2 + $0x7d0] sm:$0xff]
    %v488 = vld [vmem:[#allocation2 + $0x7d8] sm:$0xff]
    %v489 = vld [vmem:[#allocation2 + $0x7e0] sm:$0xff]
    %v490 = vld [vmem:[#allocation2 + $0x7e8] sm:$0xff]
    %v491 = vld [vmem:[#allocation2 + $0x7f0] sm:$0xff]
    %v492 = vld [vmem:[#allocation2 + $0x7f8] sm:$0xff]
    %v493 = vld [vmem:[%s4] sm:$0xf]
    %v495 = vlaneseq
    %v496 = vshrl.u32 %v495, 7
    %v497 = vsub.s32 0, %v496
    %v498 = vrot.slane %v493, %v497
    %v499 = vlaneseq
    %v500 = vshrl.u32 %v499, 7
    %v501 = vsub.s32 1, %v500
    %v502 = vrot.slane %v493, %v501
    %v503 = vlaneseq
    %v504 = vshrl.u32 %v503, 7
    %v505 = vsub.s32 2, %v504
    %v506 = vrot.slane %v493, %v505
    %v507 = vlaneseq
    %v508 = vshrl.u32 %v507, 7
    %v509 = vsub.s32 3, %v508
    %v510 = vrot.slane %v493, %v509
    %515 = vmatprep.subr.mxu0 %v238
    %516 = vmatpush1.msra.mxu0 %v237
    %517 = vmatprep.subr.mxu0 %v242
    %518 = vmatpush1.msra.mxu0 %v241
    %519 = vmatprep.subr.mxu0 %v246
    %520 = vmatpush1.msra.mxu0 %v245
    %521 = vmatprep.subr.mxu0 %v250
    %522 = vmatpush1.msra.mxu0 %v249
    %523 = vmatprep.subr.mxu0 %v254
    %524 = vmatpush1.msra.mxu0 %v253
    %525 = vmatprep.subr.mxu0 %v258
    %526 = vmatpush1.msra.mxu0 %v257
    %527 = vmatprep.subr.mxu0 %v262
    %528 = vmatpush1.msra.mxu0 %v261
    %529 = vmatprep.subr.mxu0 %v266
    %530 = vmatpush1.msra.mxu0 %v265
    %531 = vmatprep.subr.mxu0 %v270
    %532 = vmatpush1.msra.mxu0 %v269
    %533 = vmatprep.subr.mxu0 %v274
    %534 = vmatpush1.msra.mxu0 %v273
    %535 = vmatprep.subr.mxu0 %v278
    %536 = vmatpush1.msra.mxu0 %v277
    %537 = vmatprep.subr.mxu0 %v282
    %538 = vmatpush1.msra.mxu0 %v281
    %539 = vmatprep.subr.mxu0 %v286
    %540 = vmatpush1.msra.mxu0 %v285
    %541 = vmatprep.subr.mxu0 %v290
    %542 = vmatpush1.msra.mxu0 %v289
    %543 = vmatprep.subr.mxu0 %v294
    %544 = vmatpush1.msra.mxu0 %v293
    %545 = vmatprep.subr.mxu0 %v298
    %546 = vmatpush1.msra.mxu0 %v297
    %547 = vmatprep.subr.mxu0 %v302
    %548 = vmatpush1.msra.mxu0 %v301
    %549 = vmatprep.subr.mxu0 %v306
    %550 = vmatpush1.msra.mxu0 %v305
    %551 = vmatprep.subr.mxu0 %v310
    %552 = vmatpush1.msra.mxu0 %v309
    %553 = vmatprep.subr.mxu0 %v314
    %554 = vmatpush1.msra.mxu0 %v313
    %555 = vmatprep.subr.mxu0 %v318
    %556 = vmatpush1.msra.mxu0 %v317
    %557 = vmatprep.subr.mxu0 %v322
    %558 = vmatpush1.msra.mxu0 %v321
    %559 = vmatprep.subr.mxu0 %v326
    %560 = vmatpush1.msra.mxu0 %v325
    %561 = vmatprep.subr.mxu0 %v330
    %562 = vmatpush1.msra.mxu0 %v329
    %563 = vmatprep.subr.mxu0 %v334
    %564 = vmatpush1.msra.mxu0 %v333
    %565 = vmatprep.subr.mxu0 %v338
    %566 = vmatpush1.msra.mxu0 %v337
    %567 = vmatprep.subr.mxu0 %v342
    %568 = vmatpush1.msra.mxu0 %v341
    %569 = vmatprep.subr.mxu0 %v346
    %570 = vmatpush1.msra.mxu0 %v345
    %571 = vmatprep.subr.mxu0 %v350
    %572 = vmatpush1.msra.mxu0 %v349
    %573 = vmatprep.subr.mxu0 %v354
    %574 = vmatpush1.msra.mxu0 %v353
    %575 = vmatprep.subr.mxu0 %v358
    %576 = vmatpush1.msra.mxu0 %v357
    %577 = vmatprep.subr.mxu0 %v362
    %578 = vmatpush1.msra.mxu0 %v361
    %579 = vmatprep.mubr.f32.mxu0 %v234
    %580 = vmatmul.mubr.f32.gmra.mrb[0].mxu0 %v233
    %v581 = vpop.f32.mrb[0].mxu0
    %v582 = vadd.f32 %v498, %v581
    %v583 = vpop.f32.mrb[0].mxu0
    %v584 = vadd.f32 %v502, %v583
    %585 = vdwg.mxu0
    %586 = vmatprep.subr.mxu0 %v366
    %587 = vmatpush1.msra.mxu0 %v365
    %588 = vmatprep.subr.mxu0 %v370
    %589 = vmatpush1.msra.mxu0 %v369
    %590 = vmatprep.subr.mxu0 %v374
    %591 = vmatpush1.msra.mxu0 %v373
    %592 = vmatprep.subr.mxu0 %v378
    %593 = vmatpush1.msra.mxu0 %v377
    %594 = vmatprep.subr.mxu0 %v382
    %595 = vmatpush1.msra.mxu0 %v381
    %596 = vmatprep.subr.mxu0 %v386
    %597 = vmatpush1.msra.mxu0 %v385
    %598 = vmatprep.subr.mxu0 %v390
    %599 = vmatpush1.msra.mxu0 %v389
    %600 = vmatprep.subr.mxu0 %v394
    %601 = vmatpush1.msra.mxu0 %v393
    %602 = vmatprep.subr.mxu0 %v398
    %603 = vmatpush1.msra.mxu0 %v397
    %604 = vmatprep.subr.mxu0 %v402
    %605 = vmatpush1.msra.mxu0 %v401
    %606 = vmatprep.subr.mxu0 %v406
    %607 = vmatpush1.msra.mxu0 %v405
    %608 = vmatprep.subr.mxu0 %v410
    %609 = vmatpush1.msra.mxu0 %v409
    %610 = vmatprep.subr.mxu0 %v414
    %611 = vmatpush1.msra.mxu0 %v413
    %612 = vmatprep.subr.mxu0 %v418
    %613 = vmatpush1.msra.mxu0 %v417
    %614 = vmatprep.subr.mxu0 %v422
    %615 = vmatpush1.msra.mxu0 %v421
    %616 = vmatprep.subr.mxu0 %v426
    %617 = vmatpush1.msra.mxu0 %v425
    %618 = vmatprep.subr.mxu0 %v430
    %619 = vmatpush1.msra.mxu0 %v429
    %620 = vmatprep.subr.mxu0 %v434
    %621 = vmatpush1.msra.mxu0 %v433
    %622 = vmatprep.subr.mxu0 %v438
    %623 = vmatpush1.msra.mxu0 %v437
    %624 = vmatprep.subr.mxu0 %v442
    %625 = vmatpush1.msra.mxu0 %v441
    %626 = vmatprep.subr.mxu0 %v446
    %627 = vmatpush1.msra.mxu0 %v445
    %628 = vmatprep.subr.mxu0 %v450
    %629 = vmatpush1.msra.mxu0 %v449
    %630 = vmatprep.subr.mxu0 %v454
    %631 = vmatpush1.msra.mxu0 %v453
    %632 = vmatprep.subr.mxu0 %v458
    %633 = vmatpush1.msra.mxu0 %v457
    %634 = vmatprep.subr.mxu0 %v462
    %635 = vmatpush1.msra.mxu0 %v461
    %636 = vmatprep.subr.mxu0 %v466
    %637 = vmatpush1.msra.mxu0 %v465
    %638 = vmatprep.subr.mxu0 %v470
    %639 = vmatpush1.msra.mxu0 %v469
    %640 = vmatprep.subr.mxu0 %v474
    %641 = vmatpush1.msra.mxu0 %v473
    %642 = vmatprep.subr.mxu0 %v478
    %643 = vmatpush1.msra.mxu0 %v477
    %644 = vmatprep.subr.mxu0 %v482
    %645 = vmatpush1.msra.mxu0 %v481
    %646 = vmatprep.subr.mxu0 %v486
    %647 = vmatpush1.msra.mxu0 %v485
    %648 = vmatprep.subr.mxu0 %v490
    %649 = vmatpush1.msra.mxu0 %v489
    %650 = vmatprep.mubr.f32.mxu0 %v236
    %651 = vmatmul.mubr.f32.gmra.mrb[0].mxu0 %v235
    %v652 = vpop.f32.mrb[0].mxu0
    %v653 = vadd.f32 %v582, %v652
    %v654 = vpop.f32.mrb[0].mxu0
    %v655 = vadd.f32 %v584, %v654
    %656 = vdwg.mxu0
    %657 = vmatprep.subr.mxu0 %v240
    %658 = vmatpush1.msra.mxu0 %v239
    %659 = vmatprep.subr.mxu0 %v244
    %660 = vmatpush1.msra.mxu0 %v243
    %661 = vmatprep.subr.mxu0 %v248
    %662 = vmatpush1.msra.mxu0 %v247
    %663 = vmatprep.subr.mxu0 %v252
    %664 = vmatpush1.msra.mxu0 %v251
    %665 = vmatprep.subr.mxu0 %v256
    %666 = vmatpush1.msra.mxu0 %v255
    %667 = vmatprep.subr.mxu0 %v260
    %668 = vmatpush1.msra.mxu0 %v259
    %669 = vmatprep.subr.mxu0 %v264
    %670 = vmatpush1.msra.mxu0 %v263
    %671 = vmatprep.subr.mxu0 %v268
    %672 = vmatpush1.msra.mxu0 %v267
    %673 = vmatprep.subr.mxu0 %v272
    %674 = vmatpush1.msra.mxu0 %v271
    %675 = vmatprep.subr.mxu0 %v276
    %676 = vmatpush1.msra.mxu0 %v275
    %677 = vmatprep.subr.mxu0 %v280
    %678 = vmatpush1.msra.mxu0 %v279
    %679 = vmatprep.subr.mxu0 %v284
    %680 = vmatpush1.msra.mxu0 %v283
    %681 = vmatprep.subr.mxu0 %v288
    %682 = vmatpush1.msra.mxu0 %v287
    %683 = vmatprep.subr.mxu0 %v292
    %684 = vmatpush1.msra.mxu0 %v291
    %685 = vmatprep.subr.mxu0 %v296
    %686 = vmatpush1.msra.mxu0 %v295
    %687 = vmatprep.subr.mxu0 %v300
    %688 = vmatpush1.msra.mxu0 %v299
    %689 = vmatprep.subr.mxu0 %v304
    %690 = vmatpush1.msra.mxu0 %v303
    %691 = vmatprep.subr.mxu0 %v308
    %692 = vmatpush1.msra.mxu0 %v307
    %693 = vmatprep.subr.mxu0 %v312
    %694 = vmatpush1.msra.mxu0 %v311
    %695 = vmatprep.subr.mxu0 %v316
    %696 = vmatpush1.msra.mxu0 %v315
    %697 = vmatprep.subr.mxu0 %v320
    %698 = vmatpush1.msra.mxu0 %v319
    %699 = vmatprep.subr.mxu0 %v324
    %700 = vmatpush1.msra.mxu0 %v323
    %701 = vmatprep.subr.mxu0 %v328
    %702 = vmatpush1.msra.mxu0 %v327
    %703 = vmatprep.subr.mxu0 %v332
    %704 = vmatpush1.msra.mxu0 %v331
    %705 = vmatprep.subr.mxu0 %v336
    %706 = vmatpush1.msra.mxu0 %v335
    %707 = vmatprep.subr.mxu0 %v340
    %708 = vmatpush1.msra.mxu0 %v339
    %709 = vmatprep.subr.mxu0 %v344
    %710 = vmatpush1.msra.mxu0 %v343
    %711 = vmatprep.subr.mxu0 %v348
    %712 = vmatpush1.msra.mxu0 %v347
    %713 = vmatprep.subr.mxu0 %v352
    %714 = vmatpush1.msra.mxu0 %v351
    %715 = vmatprep.subr.mxu0 %v356
    %716 = vmatpush1.msra.mxu0 %v355
    %717 = vmatprep.subr.mxu0 %v360
    %718 = vmatpush1.msra.mxu0 %v359
    %719 = vmatprep.subr.mxu0 %v364
    %720 = vmatpush1.msra.mxu0 %v363
    %721 = vmatprep.mubr.f32.mxu0 %v234
    %722 = vmatmul.mubr.f32.gmra.mrb[0].mxu0 %v233
    %v723 = vpop.f32.mrb[0].mxu0
    %v724 = vadd.f32 %v506, %v723
    %v725 = vpop.f32.mrb[0].mxu0
    %v726 = vadd.f32 %v510, %v725
    %727 = vdwg.mxu0
    %728 = vmatprep.subr.mxu0 %v368
    %729 = vmatpush1.msra.mxu0 %v367
    %730 = vmatprep.subr.mxu0 %v372
    %731 = vmatpush1.msra.mxu0 %v371
    %732 = vmatprep.subr.mxu0 %v376
    %733 = vmatpush1.msra.mxu0 %v375
    %734 = vmatprep.subr.mxu0 %v380
    %735 = vmatpush1.msra.mxu0 %v379
    %736 = vmatprep.subr.mxu0 %v384
    %737 = vmatpush1.msra.mxu0 %v383
    %738 = vmatprep.subr.mxu0 %v388
    %739 = vmatpush1.msra.mxu0 %v387
    %740 = vmatprep.subr.mxu0 %v392
    %741 = vmatpush1.msra.mxu0 %v391
    %742 = vmatprep.subr.mxu0 %v396
    %743 = vmatpush1.msra.mxu0 %v395
    %744 = vmatprep.subr.mxu0 %v400
    %745 = vmatpush1.msra.mxu0 %v399
    %746 = vmatprep.subr.mxu0 %v404
    %747 = vmatpush1.msra.mxu0 %v403
    %748 = vmatprep.subr.mxu0 %v408
    %749 = vmatpush1.msra.mxu0 %v407
    %750 = vmatprep.subr.mxu0 %v412
    %751 = vmatpush1.msra.mxu0 %v411
    %752 = vmatprep.subr.mxu0 %v416
    %753 = vmatpush1.msra.mxu0 %v415
    %754 = vmatprep.subr.mxu0 %v420
    %755 = vmatpush1.msra.mxu0 %v419
    %756 = vmatprep.subr.mxu0 %v424
    %757 = vmatpush1.msra.mxu0 %v423
    %758 = vmatprep.subr.mxu0 %v428
    %759 = vmatpush1.msra.mxu0 %v427
    %760 = vmatprep.subr.mxu0 %v432
    %761 = vmatpush1.msra.mxu0 %v431
    %762 = vmatprep.subr.mxu0 %v436
    %763 = vmatpush1.msra.mxu0 %v435
    %764 = vmatprep.subr.mxu0 %v440
    %765 = vmatpush1.msra.mxu0 %v439
    %766 = vmatprep.subr.mxu0 %v444
    %767 = vmatpush1.msra.mxu0 %v443
    %768 = vmatprep.subr.mxu0 %v448
    %769 = vmatpush1.msra.mxu0 %v447
    %770 = vmatprep.subr.mxu0 %v452
    %771 = vmatpush1.msra.mxu0 %v451
    %772 = vmatprep.subr.mxu0 %v456
    %773 = vmatpush1.msra.mxu0 %v455
    %774 = vmatprep.subr.mxu0 %v460
    %775 = vmatpush1.msra.mxu0 %v459
    %776 = vmatprep.subr.mxu0 %v464
    %777 = vmatpush1.msra.mxu0 %v463
    %778 = vmatprep.subr.mxu0 %v468
    %779 = vmatpush1.msra.mxu0 %v467
    %780 = vmatprep.subr.mxu0 %v472
    %781 = vmatpush1.msra.mxu0 %v471
    %782 = vmatprep.subr.mxu0 %v476
    %783 = vmatpush1.msra.mxu0 %v475
    %784 = vmatprep.subr.mxu0 %v480
    %785 = vmatpush1.msra.mxu0 %v479
    %786 = vmatprep.subr.mxu0 %v484
    %787 = vmatpush1.msra.mxu0 %v483
    %788 = vmatprep.subr.mxu0 %v488
    %789 = vmatpush1.msra.mxu0 %v487
    %790 = vmatprep.subr.mxu0 %v492
    %791 = vmatpush1.msra.mxu0 %v491
    %792 = vmatprep.mubr.f32.mxu0 %v236
    %793 = vmatmul.mubr.f32.gmra.mrb[0].mxu0 %v235
    %v794 = vpop.f32.mrb[0].mxu0
    %v795 = vadd.f32 %v724, %v794
    %v796 = vpop.f32.mrb[0].mxu0
    %v797 = vadd.f32 %v726, %v796
    %798 = vdwg.mxu0
    %v799 = vmax.f32 %v653, 0.0
    %v800 = vmax.f32 %v655, 0.0
    %v801 = vmax.f32 %v795, 0.0
    %v802 = vmax.f32 %v797, 0.0
    %v803 = vld [vmem:[#allocation4] sm:$0xff]
    %v804 = vld [vmem:[#allocation4 + $0x8] sm:$0xff]
    %v805 = vld [vmem:[#allocation4 + $0x10] sm:$0xff]
    %v806 = vld [vmem:[#allocation4 + $0x18] sm:$0xff]
    %v807 = vld [vmem:[#allocation4 + $0x20] sm:$0xff]
    %v808 = vld [vmem:[#allocation4 + $0x28] sm:$0xff]
    %v809 = vld [vmem:[#allocation4 + $0x30] sm:$0xff]
    %v810 = vld [vmem:[#allocation4 + $0x38] sm:$0xff]
    %v811 = vld [vmem:[#allocation4 + $0x40] sm:$0xff]
    %v812 = vld [vmem:[#allocation4 + $0x48] sm:$0xff]
    %v813 = vld [vmem:[#allocation4 + $0x50] sm:$0xff]
    %v814 = vld [vmem:[#allocation4 + $0x58] sm:$0xff]
    %v815 = vld [vmem:[#allocation4 + $0x60] sm:$0xff]
    %v816 = vld [vmem:[#allocation4 + $0x68] sm:$0xff]
    %v817 = vld [vmem:[#allocation4 + $0x70] sm:$0xff]
    %v818 = vld [vmem:[#allocation4 + $0x78] sm:$0xff]
    %v819 = vld [vmem:[#allocation4 + $0x80] sm:$0xff]
    %v820 = vld [vmem:[#allocation4 + $0x88] sm:$0xff]
    %v821 = vld [vmem:[#allocation4 + $0x90] sm:$0xff]
    %v822 = vld [vmem:[#allocation4 + $0x98] sm:$0xff]
    %v823 = vld [vmem:[#allocation4 + $0xa0] sm:$0xff]
    %v824 = vld [vmem:[#allocation4 + $0xa8] sm:$0xff]
    %v825 = vld [vmem:[#allocation4 + $0xb0] sm:$0xff]
    %v826 = vld [vmem:[#allocation4 + $0xb8] sm:$0xff]
    %v827 = vld [vmem:[#allocation4 + $0xc0] sm:$0xff]
    %v828 = vld [vmem:[#allocation4 + $0xc8] sm:$0xff]
    %v829 = vld [vmem:[#allocation4 + $0xd0] sm:$0xff]
    %v830 = vld [vmem:[#allocation4 + $0xd8] sm:$0xff]
    %v831 = vld [vmem:[#allocation4 + $0xe0] sm:$0xff]
    %v832 = vld [vmem:[#allocation4 + $0xe8] sm:$0xff]
    %v833 = vld [vmem:[#allocation4 + $0xf0] sm:$0xff]
    %v834 = vld [vmem:[#allocation4 + $0xf8] sm:$0xff]
    %v835 = vld [vmem:[#allocation4 + $0x100] sm:$0xff]
    %v836 = vld [vmem:[#allocation4 + $0x108] sm:$0xff]
    %v837 = vld [vmem:[#allocation4 + $0x110] sm:$0xff]
    %v838 = vld [vmem:[#allocation4 + $0x118] sm:$0xff]
    %v839 = vld [vmem:[#allocation4 + $0x120] sm:$0xff]
    %v840 = vld [vmem:[#allocation4 + $0x128] sm:$0xff]
    %v841 = vld [vmem:[#allocation4 + $0x130] sm:$0xff]
    %v842 = vld [vmem:[#allocation4 + $0x138] sm:$0xff]
    %v843 = vld [vmem:[#allocation4 + $0x140] sm:$0xff]
    %v844 = vld [vmem:[#allocation4 + $0x148] sm:$0xff]
    %v845 = vld [vmem:[#allocation4 + $0x150] sm:$0xff]
    %v846 = vld [vmem:[#allocation4 + $0x158] sm:$0xff]
    %v847 = vld [vmem:[#allocation4 + $0x160] sm:$0xff]
    %v848 = vld [vmem:[#allocation4 + $0x168] sm:$0xff]
    %v849 = vld [vmem:[#allocation4 + $0x170] sm:$0xff]
    %v850 = vld [vmem:[#allocation4 + $0x178] sm:$0xff]
    %v851 = vld [vmem:[#allocation4 + $0x180] sm:$0xff]
    %v852 = vld [vmem:[#allocation4 + $0x188] sm:$0xff]
    %v853 = vld [vmem:[#allocation4 + $0x190] sm:$0xff]
    %v854 = vld [vmem:[#allocation4 + $0x198] sm:$0xff]
    %v855 = vld [vmem:[#allocation4 + $0x1a0] sm:$0xff]
    %v856 = vld [vmem:[#allocation4 + $0x1a8] sm:$0xff]
    %v857 = vld [vmem:[#allocation4 + $0x1b0] sm:$0xff]
    %v858 = vld [vmem:[#allocation4 + $0x1b8] sm:$0xff]
    %v859 = vld [vmem:[#allocation4 + $0x1c0] sm:$0xff]
    %v860 = vld [vmem:[#allocation4 + $0x1c8] sm:$0xff]
    %v861 = vld [vmem:[#allocation4 + $0x1d0] sm:$0xff]
    %v862 = vld [vmem:[#allocation4 + $0x1d8] sm:$0xff]
    %v863 = vld [vmem:[#allocation4 + $0x1e0] sm:$0xff]
    %v864 = vld [vmem:[#allocation4 + $0x1e8] sm:$0xff]
    %v865 = vld [vmem:[#allocation4 + $0x1f0] sm:$0xff]
    %v866 = vld [vmem:[#allocation4 + $0x1f8] sm:$0xff]
    %v867 = vld [vmem:[#allocation4 + $0x200] sm:$0xff]
    %v868 = vld [vmem:[#allocation4 + $0x208] sm:$0xff]
    %v869 = vld [vmem:[#allocation4 + $0x210] sm:$0xff]
    %v870 = vld [vmem:[#allocation4 + $0x218] sm:$0xff]
    %v871 = vld [vmem:[#allocation4 + $0x220] sm:$0xff]
    %v872 = vld [vmem:[#allocation4 + $0x228] sm:$0xff]
    %v873 = vld [vmem:[#allocation4 + $0x230] sm:$0xff]
    %v874 = vld [vmem:[#allocation4 + $0x238] sm:$0xff]
    %v875 = vld [vmem:[#allocation4 + $0x240] sm:$0xff]
    %v876 = vld [vmem:[#allocation4 + $0x248] sm:$0xff]
    %v877 = vld [vmem:[#allocation4 + $0x250] sm:$0xff]
    %v878 = vld [vmem:[#allocation4 + $0x258] sm:$0xff]
    %v879 = vld [vmem:[#allocation4 + $0x260] sm:$0xff]
    %v880 = vld [vmem:[#allocation4 + $0x268] sm:$0xff]
    %v881 = vld [vmem:[#allocation4 + $0x270] sm:$0xff]
    %v882 = vld [vmem:[#allocation4 + $0x278] sm:$0xff]
    %v883 = vld [vmem:[#allocation4 + $0x280] sm:$0xff]
    %v884 = vld [vmem:[#allocation4 + $0x288] sm:$0xff]
    %v885 = vld [vmem:[#allocation4 + $0x290] sm:$0xff]
    %v886 = vld [vmem:[#allocation4 + $0x298] sm:$0xff]
    %v887 = vld [vmem:[#allocation4 + $0x2a0] sm:$0xff]
    %v888 = vld [vmem:[#allocation4 + $0x2a8] sm:$0xff]
    %v889 = vld [vmem:[#allocation4 + $0x2b0] sm:$0xff]
    %v890 = vld [vmem:[#allocation4 + $0x2b8] sm:$0xff]
    %v891 = vld [vmem:[#allocation4 + $0x2c0] sm:$0xff]
    %v892 = vld [vmem:[#allocation4 + $0x2c8] sm:$0xff]
    %v893 = vld [vmem:[#allocation4 + $0x2d0] sm:$0xff]
    %v894 = vld [vmem:[#allocation4 + $0x2d8] sm:$0xff]
    %v895 = vld [vmem:[#allocation4 + $0x2e0] sm:$0xff]
    %v896 = vld [vmem:[#allocation4 + $0x2e8] sm:$0xff]
    %v897 = vld [vmem:[#allocation4 + $0x2f0] sm:$0xff]
    %v898 = vld [vmem:[#allocation4 + $0x2f8] sm:$0xff]
    %v899 = vld [vmem:[#allocation4 + $0x300] sm:$0xff]
    %v900 = vld [vmem:[#allocation4 + $0x308] sm:$0xff]
    %v901 = vld [vmem:[#allocation4 + $0x310] sm:$0xff]
    %v902 = vld [vmem:[#allocation4 + $0x318] sm:$0xff]
    %v903 = vld [vmem:[#allocation4 + $0x320] sm:$0xff]
    %v904 = vld [vmem:[#allocation4 + $0x328] sm:$0xff]
    %v905 = vld [vmem:[#allocation4 + $0x330] sm:$0xff]
    %v906 = vld [vmem:[#allocation4 + $0x338] sm:$0xff]
    %v907 = vld [vmem:[#allocation4 + $0x340] sm:$0xff]
    %v908 = vld [vmem:[#allocation4 + $0x348] sm:$0xff]
    %v909 = vld [vmem:[#allocation4 + $0x350] sm:$0xff]
    %v910 = vld [vmem:[#allocation4 + $0x358] sm:$0xff]
    %v911 = vld [vmem:[#allocation4 + $0x360] sm:$0xff]
    %v912 = vld [vmem:[#allocation4 + $0x368] sm:$0xff]
    %v913 = vld [vmem:[#allocation4 + $0x370] sm:$0xff]
    %v914 = vld [vmem:[#allocation4 + $0x378] sm:$0xff]
    %v915 = vld [vmem:[#allocation4 + $0x380] sm:$0xff]
    %v916 = vld [vmem:[#allocation4 + $0x388] sm:$0xff]
    %v917 = vld [vmem:[#allocation4 + $0x390] sm:$0xff]
    %v918 = vld [vmem:[#allocation4 + $0x398] sm:$0xff]
    %v919 = vld [vmem:[#allocation4 + $0x3a0] sm:$0xff]
    %v920 = vld [vmem:[#allocation4 + $0x3a8] sm:$0xff]
    %v921 = vld [vmem:[#allocation4 + $0x3b0] sm:$0xff]
    %v922 = vld [vmem:[#allocation4 + $0x3b8] sm:$0xff]
    %v923 = vld [vmem:[#allocation4 + $0x3c0] sm:$0xff]
    %v924 = vld [vmem:[#allocation4 + $0x3c8] sm:$0xff]
    %v925 = vld [vmem:[#allocation4 + $0x3d0] sm:$0xff]
    %v926 = vld [vmem:[#allocation4 + $0x3d8] sm:$0xff]
    %v927 = vld [vmem:[#allocation4 + $0x3e0] sm:$0xff]
    %v928 = vld [vmem:[#allocation4 + $0x3e8] sm:$0xff]
    %v929 = vld [vmem:[#allocation4 + $0x3f0] sm:$0xff]
    %v930 = vld [vmem:[#allocation4 + $0x3f8] sm:$0xff]
    %v931 = vld [vmem:[#allocation4 + $0x400] sm:$0xff]
    %v932 = vld [vmem:[#allocation4 + $0x408] sm:$0xff]
    %v933 = vld [vmem:[#allocation4 + $0x410] sm:$0xff]
    %v934 = vld [vmem:[#allocation4 + $0x418] sm:$0xff]
    %v935 = vld [vmem:[#allocation4 + $0x420] sm:$0xff]
    %v936 = vld [vmem:[#allocation4 + $0x428] sm:$0xff]
    %v937 = vld [vmem:[#allocation4 + $0x430] sm:$0xff]
    %v938 = vld [vmem:[#allocation4 + $0x438] sm:$0xff]
    %v939 = vld [vmem:[#allocation4 + $0x440] sm:$0xff]
    %v940 = vld [vmem:[#allocation4 + $0x448] sm:$0xff]
    %v941 = vld [vmem:[#allocation4 + $0x450] sm:$0xff]
    %v942 = vld [vmem:[#allocation4 + $0x458] sm:$0xff]
    %v943 = vld [vmem:[#allocation4 + $0x460] sm:$0xff]
    %v944 = vld [vmem:[#allocation4 + $0x468] sm:$0xff]
    %v945 = vld [vmem:[#allocation4 + $0x470] sm:$0xff]
    %v946 = vld [vmem:[#allocation4 + $0x478] sm:$0xff]
    %v947 = vld [vmem:[#allocation4 + $0x480] sm:$0xff]
    %v948 = vld [vmem:[#allocation4 + $0x488] sm:$0xff]
    %v949 = vld [vmem:[#allocation4 + $0x490] sm:$0xff]
    %v950 = vld [vmem:[#allocation4 + $0x498] sm:$0xff]
    %v951 = vld [vmem:[#allocation4 + $0x4a0] sm:$0xff]
    %v952 = vld [vmem:[#allocation4 + $0x4a8] sm:$0xff]
    %v953 = vld [vmem:[#allocation4 + $0x4b0] sm:$0xff]
    %v954 = vld [vmem:[#allocation4 + $0x4b8] sm:$0xff]
    %v955 = vld [vmem:[#allocation4 + $0x4c0] sm:$0xff]
    %v956 = vld [vmem:[#allocation4 + $0x4c8] sm:$0xff]
    %v957 = vld [vmem:[#allocation4 + $0x4d0] sm:$0xff]
    %v958 = vld [vmem:[#allocation4 + $0x4d8] sm:$0xff]
    %v959 = vld [vmem:[#allocation4 + $0x4e0] sm:$0xff]
    %v960 = vld [vmem:[#allocation4 + $0x4e8] sm:$0xff]
    %v961 = vld [vmem:[#allocation4 + $0x4f0] sm:$0xff]
    %v962 = vld [vmem:[#allocation4 + $0x4f8] sm:$0xff]
    %v963 = vld [vmem:[#allocation4 + $0x500] sm:$0xff]
    %v964 = vld [vmem:[#allocation4 + $0x508] sm:$0xff]
    %v965 = vld [vmem:[#allocation4 + $0x510] sm:$0xff]
    %v966 = vld [vmem:[#allocation4 + $0x518] sm:$0xff]
    %v967 = vld [vmem:[#allocation4 + $0x520] sm:$0xff]
    %v968 = vld [vmem:[#allocation4 + $0x528] sm:$0xff]
    %v969 = vld [vmem:[#allocation4 + $0x530] sm:$0xff]
    %v970 = vld [vmem:[#allocation4 + $0x538] sm:$0xff]
    %v971 = vld [vmem:[#allocation4 + $0x540] sm:$0xff]
    %v972 = vld [vmem:[#allocation4 + $0x548] sm:$0xff]
    %v973 = vld [vmem:[#allocation4 + $0x550] sm:$0xff]
    %v974 = vld [vmem:[#allocation4 + $0x558] sm:$0xff]
    %v975 = vld [vmem:[#allocation4 + $0x560] sm:$0xff]
    %v976 = vld [vmem:[#allocation4 + $0x568] sm:$0xff]
    %v977 = vld [vmem:[#allocation4 + $0x570] sm:$0xff]
    %v978 = vld [vmem:[#allocation4 + $0x578] sm:$0xff]
    %v979 = vld [vmem:[#allocation4 + $0x580] sm:$0xff]
    %v980 = vld [vmem:[#allocation4 + $0x588] sm:$0xff]
    %v981 = vld [vmem:[#allocation4 + $0x590] sm:$0xff]
    %v982 = vld [vmem:[#allocation4 + $0x598] sm:$0xff]
    %v983 = vld [vmem:[#allocation4 + $0x5a0] sm:$0xff]
    %v984 = vld [vmem:[#allocation4 + $0x5a8] sm:$0xff]
    %v985 = vld [vmem:[#allocation4 + $0x5b0] sm:$0xff]
    %v986 = vld [vmem:[#allocation4 + $0x5b8] sm:$0xff]
    %v987 = vld [vmem:[#allocation4 + $0x5c0] sm:$0xff]
    %v988 = vld [vmem:[#allocation4 + $0x5c8] sm:$0xff]
    %v989 = vld [vmem:[#allocation4 + $0x5d0] sm:$0xff]
    %v990 = vld [vmem:[#allocation4 + $0x5d8] sm:$0xff]
    %v991 = vld [vmem:[#allocation4 + $0x5e0] sm:$0xff]
    %v992 = vld [vmem:[#allocation4 + $0x5e8] sm:$0xff]
    %v993 = vld [vmem:[#allocation4 + $0x5f0] sm:$0xff]
    %v994 = vld [vmem:[#allocation4 + $0x5f8] sm:$0xff]
    %v995 = vld [vmem:[#allocation4 + $0x600] sm:$0xff]
    %v996 = vld [vmem:[#allocation4 + $0x608] sm:$0xff]
    %v997 = vld [vmem:[#allocation4 + $0x610] sm:$0xff]
    %v998 = vld [vmem:[#allocation4 + $0x618] sm:$0xff]
    %v999 = vld [vmem:[#allocation4 + $0x620] sm:$0xff]
    %v1000 = vld [vmem:[#allocation4 + $0x628] sm:$0xff]
    %v1001 = vld [vmem:[#allocation4 + $0x630] sm:$0xff]
    %v1002 = vld [vmem:[#allocation4 + $0x638] sm:$0xff]
    %v1003 = vld [vmem:[#allocation4 + $0x640] sm:$0xff]
    %v1004 = vld [vmem:[#allocation4 + $0x648] sm:$0xff]
    %v1005 = vld [vmem:[#allocation4 + $0x650] sm:$0xff]
    %v1006 = vld [vmem:[#allocation4 + $0x658] sm:$0xff]
    %v1007 = vld [vmem:[#allocation4 + $0x660] sm:$0xff]
    %v1008 = vld [vmem:[#allocation4 + $0x668] sm:$0xff]
    %v1009 = vld [vmem:[#allocation4 + $0x670] sm:$0xff]
    %v1010 = vld [vmem:[#allocation4 + $0x678] sm:$0xff]
    %v1011 = vld [vmem:[#allocation4 + $0x680] sm:$0xff]
    %v1012 = vld [vmem:[#allocation4 + $0x688] sm:$0xff]
    %v1013 = vld [vmem:[#allocation4 + $0x690] sm:$0xff]
    %v1014 = vld [vmem:[#allocation4 + $0x698] sm:$0xff]
    %v1015 = vld [vmem:[#allocation4 + $0x6a0] sm:$0xff]
    %v1016 = vld [vmem:[#allocation4 + $0x6a8] sm:$0xff]
    %v1017 = vld [vmem:[#allocation4 + $0x6b0] sm:$0xff]
    %v1018 = vld [vmem:[#allocation4 + $0x6b8] sm:$0xff]
    %v1019 = vld [vmem:[#allocation4 + $0x6c0] sm:$0xff]
    %v1020 = vld [vmem:[#allocation4 + $0x6c8] sm:$0xff]
    %v1021 = vld [vmem:[#allocation4 + $0x6d0] sm:$0xff]
    %v1022 = vld [vmem:[#allocation4 + $0x6d8] sm:$0xff]
    %v1023 = vld [vmem:[#allocation4 + $0x6e0] sm:$0xff]
    %v1024 = vld [vmem:[#allocation4 + $0x6e8] sm:$0xff]
    %v1025 = vld [vmem:[#allocation4 + $0x6f0] sm:$0xff]
    %v1026 = vld [vmem:[#allocation4 + $0x6f8] sm:$0xff]
    %v1027 = vld [vmem:[#allocation4 + $0x700] sm:$0xff]
    %v1028 = vld [vmem:[#allocation4 + $0x708] sm:$0xff]
    %v1029 = vld [vmem:[#allocation4 + $0x710] sm:$0xff]
    %v1030 = vld [vmem:[#allocation4 + $0x718] sm:$0xff]
    %v1031 = vld [vmem:[#allocation4 + $0x720] sm:$0xff]
    %v1032 = vld [vmem:[#allocation4 + $0x728] sm:$0xff]
    %v1033 = vld [vmem:[#allocation4 + $0x730] sm:$0xff]
    %v1034 = vld [vmem:[#allocation4 + $0x738] sm:$0xff]
    %v1035 = vld [vmem:[#allocation4 + $0x740] sm:$0xff]
    %v1036 = vld [vmem:[#allocation4 + $0x748] sm:$0xff]
    %v1037 = vld [vmem:[#allocation4 + $0x750] sm:$0xff]
    %v1038 = vld [vmem:[#allocation4 + $0x758] sm:$0xff]
    %v1039 = vld [vmem:[#allocation4 + $0x760] sm:$0xff]
    %v1040 = vld [vmem:[#allocation4 + $0x768] sm:$0xff]
    %v1041 = vld [vmem:[#allocation4 + $0x770] sm:$0xff]
    %v1042 = vld [vmem:[#allocation4 + $0x778] sm:$0xff]
    %v1043 = vld [vmem:[#allocation4 + $0x780] sm:$0xff]
    %v1044 = vld [vmem:[#allocation4 + $0x788] sm:$0xff]
    %v1045 = vld [vmem:[#allocation4 + $0x790] sm:$0xff]
    %v1046 = vld [vmem:[#allocation4 + $0x798] sm:$0xff]
    %v1047 = vld [vmem:[#allocation4 + $0x7a0] sm:$0xff]
    %v1048 = vld [vmem:[#allocation4 + $0x7a8] sm:$0xff]
    %v1049 = vld [vmem:[#allocation4 + $0x7b0] sm:$0xff]
    %v1050 = vld [vmem:[#allocation4 + $0x7b8] sm:$0xff]
    %v1051 = vld [vmem:[#allocation4 + $0x7c0] sm:$0xff]
    %v1052 = vld [vmem:[#allocation4 + $0x7c8] sm:$0xff]
    %v1053 = vld [vmem:[#allocation4 + $0x7d0] sm:$0xff]
    %v1054 = vld [vmem:[#allocation4 + $0x7d8] sm:$0xff]
    %v1055 = vld [vmem:[#allocation4 + $0x7e0] sm:$0xff]
    %v1056 = vld [vmem:[#allocation4 + $0x7e8] sm:$0xff]
    %v1057 = vld [vmem:[#allocation4 + $0x7f0] sm:$0xff]
    %v1058 = vld [vmem:[#allocation4 + $0x7f8] sm:$0xff]
    %v1059 = vld [vmem:[%s6] sm:$0xf]
    %v1061 = vlaneseq
    %v1062 = vshrl.u32 %v1061, 7
    %v1063 = vsub.s32 0, %v1062
    %v1064 = vrot.slane %v1059, %v1063
    %v1065 = vlaneseq
    %v1066 = vshrl.u32 %v1065, 7
    %v1067 = vsub.s32 1, %v1066
    %v1068 = vrot.slane %v1059, %v1067
    %v1069 = vlaneseq
    %v1070 = vshrl.u32 %v1069, 7
    %v1071 = vsub.s32 2, %v1070
    %v1072 = vrot.slane %v1059, %v1071
    %v1073 = vlaneseq
    %v1074 = vshrl.u32 %v1073, 7
    %v1075 = vsub.s32 3, %v1074
    %v1076 = vrot.slane %v1059, %v1075
    %1081 = vmatprep.subr.mxu0 %v804
    %1082 = vmatpush1.msra.mxu0 %v803
    %1083 = vmatprep.subr.mxu0 %v808
    %1084 = vmatpush1.msra.mxu0 %v807
    %1085 = vmatprep.subr.mxu0 %v812
    %1086 = vmatpush1.msra.mxu0 %v811
    %1087 = vmatprep.subr.mxu0 %v816
    %1088 = vmatpush1.msra.mxu0 %v815
    %1089 = vmatprep.subr.mxu0 %v820
    %1090 = vmatpush1.msra.mxu0 %v819
    %1091 = vmatprep.subr.mxu0 %v824
    %1092 = vmatpush1.msra.mxu0 %v823
    %1093 = vmatprep.subr.mxu0 %v828
    %1094 = vmatpush1.msra.mxu0 %v827
    %1095 = vmatprep.subr.mxu0 %v832
    %1096 = vmatpush1.msra.mxu0 %v831
    %1097 = vmatprep.subr.mxu0 %v836
    %1098 = vmatpush1.msra.mxu0 %v835
    %1099 = vmatprep.subr.mxu0 %v840
    %1100 = vmatpush1.msra.mxu0 %v839
    %1101 = vmatprep.subr.mxu0 %v844
    %1102 = vmatpush1.msra.mxu0 %v843
    %1103 = vmatprep.subr.mxu0 %v848
    %1104 = vmatpush1.msra.mxu0 %v847
    %1105 = vmatprep.subr.mxu0 %v852
    %1106 = vmatpush1.msra.mxu0 %v851
    %1107 = vmatprep.subr.mxu0 %v856
    %1108 = vmatpush1.msra.mxu0 %v855
    %1109 = vmatprep.subr.mxu0 %v860
    %1110 = vmatpush1.msra.mxu0 %v859
    %1111 = vmatprep.subr.mxu0 %v864
    %1112 = vmatpush1.msra.mxu0 %v863
    %1113 = vmatprep.subr.mxu0 %v868
    %1114 = vmatpush1.msra.mxu0 %v867
    %1115 = vmatprep.subr.mxu0 %v872
    %1116 = vmatpush1.msra.mxu0 %v871
    %1117 = vmatprep.subr.mxu0 %v876
    %1118 = vmatpush1.msra.mxu0 %v875
    %1119 = vmatprep.subr.mxu0 %v880
    %1120 = vmatpush1.msra.mxu0 %v879
    %1121 = vmatprep.subr.mxu0 %v884
    %1122 = vmatpush1.msra.mxu0 %v883
    %1123 = vmatprep.subr.mxu0 %v888
    %1124 = vmatpush1.msra.mxu0 %v887
    %1125 = vmatprep.subr.mxu0 %v892
    %1126 = vmatpush1.msra.mxu0 %v891
    %1127 = vmatprep.subr.mxu0 %v896
    %1128 = vmatpush1.msra.mxu0 %v895
    %1129 = vmatprep.subr.mxu0 %v900
    %1130 = vmatpush1.msra.mxu0 %v899
    %1131 = vmatprep.subr.mxu0 %v904
    %1132 = vmatpush1.msra.mxu0 %v903
    %1133 = vmatprep.subr.mxu0 %v908
    %1134 = vmatpush1.msra.mxu0 %v907
    %1135 = vmatprep.subr.mxu0 %v912
    %1136 = vmatpush1.msra.mxu0 %v911
    %1137 = vmatprep.subr.mxu0 %v916
    %1138 = vmatpush1.msra.mxu0 %v915
    %1139 = vmatprep.subr.mxu0 %v920
    %1140 = vmatpush1.msra.mxu0 %v919
    %1141 = vmatprep.subr.mxu0 %v924
    %1142 = vmatpush1.msra.mxu0 %v923
    %1143 = vmatprep.subr.mxu0 %v928
    %1144 = vmatpush1.msra.mxu0 %v927
    %1145 = vmatprep.mubr.f32.mxu0 %v800
    %1146 = vmatmul.mubr.f32.gmra.mrb[0].mxu0 %v799
    %v1147 = vpop.f32.mrb[0].mxu0
    %v1148 = vadd.f32 %v1064, %v1147
    %v1149 = vpop.f32.mrb[0].mxu0
    %v1150 = vadd.f32 %v1068, %v1149
    %1151 = vdwg.mxu0
    %1152 = vmatprep.subr.mxu0 %v932
    %1153 = vmatpush1.msra.mxu0 %v931
    %1154 = vmatprep.subr.mxu0 %v936
    %1155 = vmatpush1.msra.mxu0 %v935
    %1156 = vmatprep.subr.mxu0 %v940
    %1157 = vmatpush1.msra.mxu0 %v939
    %1158 = vmatprep.subr.mxu0 %v944
    %1159 = vmatpush1.msra.mxu0 %v943
    %1160 = vmatprep.subr.mxu0 %v948
    %1161 = vmatpush1.msra.mxu0 %v947
    %1162 = vmatprep.subr.mxu0 %v952
    %1163 = vmatpush1.msra.mxu0 %v951
    %1164 = vmatprep.subr.mxu0 %v956
    %1165 = vmatpush1.msra.mxu0 %v955
    %1166 = vmatprep.subr.mxu0 %v960
    %1167 = vmatpush1.msra.mxu0 %v959
    %1168 = vmatprep.subr.mxu0 %v964
    %1169 = vmatpush1.msra.mxu0 %v963
    %1170 = vmatprep.subr.mxu0 %v968
    %1171 = vmatpush1.msra.mxu0 %v967
    %1172 = vmatprep.subr.mxu0 %v972
    %1173 = vmatpush1.msra.mxu0 %v971
    %1174 = vmatprep.subr.mxu0 %v976
    %1175 = vmatpush1.msra.mxu0 %v975
    %1176 = vmatprep.subr.mxu0 %v980
    %1177 = vmatpush1.msra.mxu0 %v979
    %1178 = vmatprep.subr.mxu0 %v984
    %1179 = vmatpush1.msra.mxu0 %v983
    %1180 = vmatprep.subr.mxu0 %v988
    %1181 = vmatpush1.msra.mxu0 %v987
    %1182 = vmatprep.subr.mxu0 %v992
    %1183 = vmatpush1.msra.mxu0 %v991
    %1184 = vmatprep.subr.mxu0 %v996
    %1185 = vmatpush1.msra.mxu0 %v995
    %1186 = vmatprep.subr.mxu0 %v1000
    %1187 = vmatpush1.msra.mxu0 %v999
    %1188 = vmatprep.subr.mxu0 %v1004
    %1189 = vmatpush1.msra.mxu0 %v1003
    %1190 = vmatprep.subr.mxu0 %v1008
    %1191 = vmatpush1.msra.mxu0 %v1007
    %1192 = vmatprep.subr.mxu0 %v1012
    %1193 = vmatpush1.msra.mxu0 %v1011
    %1194 = vmatprep.subr.mxu0 %v1016
    %1195 = vmatpush1.msra.mxu0 %v1015
    %1196 = vmatprep.subr.mxu0 %v1020
    %1197 = vmatpush1.msra.mxu0 %v1019
    %1198 = vmatprep.subr.mxu0 %v1024
    %1199 = vmatpush1.msra.mxu0 %v1023
    %1200 = vmatprep.subr.mxu0 %v1028
    %1201 = vmatpush1.msra.mxu0 %v1027
    %1202 = vmatprep.subr.mxu0 %v1032
    %1203 = vmatpush1.msra.mxu0 %v1031
    %1204 = vmatprep.subr.mxu0 %v1036
    %1205 = vmatpush1.msra.mxu0 %v1035
    %1206 = vmatprep.subr.mxu0 %v1040
    %1207 = vmatpush1.msra.mxu0 %v1039
    %1208 = vmatprep.subr.mxu0 %v1044
    %1209 = vmatpush1.msra.mxu0 %v1043
    %1210 = vmatprep.subr.mxu0 %v1048
    %1211 = vmatpush1.msra.mxu0 %v1047
    %1212 = vmatprep.subr.mxu0 %v1052
    %1213 = vmatpush1.msra.mxu0 %v1051
    %1214 = vmatprep.subr.mxu0 %v1056
    %1215 = vmatpush1.msra.mxu0 %v1055
    %1216 = vmatprep.mubr.f32.mxu0 %v802
    %1217 = vmatmul.mubr.f32.gmra.mrb[0].mxu0 %v801
    %v1218 = vpop.f32.mrb[0].mxu0
    %v1219 = vadd.f32 %v1148, %v1218
    %v1220 = vpop.f32.mrb[0].mxu0
    %v1221 = vadd.f32 %v1150, %v1220
    %1222 = vdwg.mxu0
    %1223 = vmatprep.subr.mxu0 %v806
    %1224 = vmatpush1.msra.mxu0 %v805
    %1225 = vmatprep.subr.mxu0 %v810
    %1226 = vmatpush1.msra.mxu0 %v809
    %1227 = vmatprep.subr.mxu0 %v814
    %1228 = vmatpush1.msra.mxu0 %v813
    %1229 = vmatprep.subr.mxu0 %v818
    %1230 = vmatpush1.msra.mxu0 %v817
    %1231 = vmatprep.subr.mxu0 %v822
    %1232 = vmatpush1.msra.mxu0 %v821
    %1233 = vmatprep.subr.mxu0 %v826
    %1234 = vmatpush1.msra.mxu0 %v825
    %1235 = vmatprep.subr.mxu0 %v830
    %1236 = vmatpush1.msra.mxu0 %v829
    %1237 = vmatprep.subr.mxu0 %v834
    %1238 = vmatpush1.msra.mxu0 %v833
    %1239 = vmatprep.subr.mxu0 %v838
    %1240 = vmatpush1.msra.mxu0 %v837
    %1241 = vmatprep.subr.mxu0 %v842
    %1242 = vmatpush1.msra.mxu0 %v841
    %1243 = vmatprep.subr.mxu0 %v846
    %1244 = vmatpush1.msra.mxu0 %v845
    %1245 = vmatprep.subr.mxu0 %v850
    %1246 = vmatpush1.msra.mxu0 %v849
    %1247 = vmatprep.subr.mxu0 %v854
    %1248 = vmatpush1.msra.mxu0 %v853
    %1249 = vmatprep.subr.mxu0 %v858
    %1250 = vmatpush1.msra.mxu0 %v857
    %1251 = vmatprep.subr.mxu0 %v862
    %1252 = vmatpush1.msra.mxu0 %v861
    %1253 = vmatprep.subr.mxu0 %v866
    %1254 = vmatpush1.msra.mxu0 %v865
    %1255 = vmatprep.subr.mxu0 %v870
    %1256 = vmatpush1.msra.mxu0 %v869
    %1257 = vmatprep.subr.mxu0 %v874
    %1258 = vmatpush1.msra.mxu0 %v873
    %1259 = vmatprep.subr.mxu0 %v878
    %1260 = vmatpush1.msra.mxu0 %v877
    %1261 = vmatprep.subr.mxu0 %v882
    %1262 = vmatpush1.msra.mxu0 %v881
    %1263 = vmatprep.subr.mxu0 %v886
    %1264 = vmatpush1.msra.mxu0 %v885
    %1265 = vmatprep.subr.mxu0 %v890
    %1266 = vmatpush1.msra.mxu0 %v889
    %1267 = vmatprep.subr.mxu0 %v894
    %1268 = vmatpush1.msra.mxu0 %v893
    %1269 = vmatprep.subr.mxu0 %v898
    %1270 = vmatpush1.msra.mxu0 %v897
    %1271 = vmatprep.subr.mxu0 %v902
    %1272 = vmatpush1.msra.mxu0 %v901
    %1273 = vmatprep.subr.mxu0 %v906
    %1274 = vmatpush1.msra.mxu0 %v905
    %1275 = vmatprep.subr.mxu0 %v910
    %1276 = vmatpush1.msra.mxu0 %v909
    %1277 = vmatprep.subr.mxu0 %v914
    %1278 = vmatpush1.msra.mxu0 %v913
    %1279 = vmatprep.subr.mxu0 %v918
    %1280 = vmatpush1.msra.mxu0 %v917
    %1281 = vmatprep.subr.mxu0 %v922
    %1282 = vmatpush1.msra.mxu0 %v921
    %1283 = vmatprep.subr.mxu0 %v926
    %1284 = vmatpush1.msra.mxu0 %v925
    %1285 = vmatprep.subr.mxu0 %v930
    %1286 = vmatpush1.msra.mxu0 %v929
    %1287 = vmatprep.mubr.f32.mxu0 %v800
    %1288 = vmatmul.mubr.f32.gmra.mrb[0].mxu0 %v799
    %v1289 = vpop.f32.mrb[0].mxu0
    %v1290 = vadd.f32 %v1072, %v1289
    %v1291 = vpop.f32.mrb[0].mxu0
    %v1292 = vadd.f32 %v1076, %v1291
    %1293 = vdwg.mxu0
    %1294 = vmatprep.subr.mxu0 %v934
    %1295 = vmatpush1.msra.mxu0 %v933
    %1296 = vmatprep.subr.mxu0 %v938
    %1297 = vmatpush1.msra.mxu0 %v937
    %1298 = vmatprep.subr.mxu0 %v942
    %1299 = vmatpush1.msra.mxu0 %v941
    %1300 = vmatprep.subr.mxu0 %v946
    %1301 = vmatpush1.msra.mxu0 %v945
    %1302 = vmatprep.subr.mxu0 %v950
    %1303 = vmatpush1.msra.mxu0 %v949
    %1304 = vmatprep.subr.mxu0 %v954
    %1305 = vmatpush1.msra.mxu0 %v953
    %1306 = vmatprep.subr.mxu0 %v958
    %1307 = vmatpush1.msra.mxu0 %v957
    %1308 = vmatprep.subr.mxu0 %v962
    %1309 = vmatpush1.msra.mxu0 %v961
    %1310 = vmatprep.subr.mxu0 %v966
    %1311 = vmatpush1.msra.mxu0 %v965
    %1312 = vmatprep.subr.mxu0 %v970
    %1313 = vmatpush1.msra.mxu0 %v969
    %1314 = vmatprep.subr.mxu0 %v974
    %1315 = vmatpush1.msra.mxu0 %v973
    %1316 = vmatprep.subr.mxu0 %v978
    %1317 = vmatpush1.msra.mxu0 %v977
    %1318 = vmatprep.subr.mxu0 %v982
    %1319 = vmatpush1.msra.mxu0 %v981
    %1320 = vmatprep.subr.mxu0 %v986
    %1321 = vmatpush1.msra.mxu0 %v985
    %1322 = vmatprep.subr.mxu0 %v990
    %1323 = vmatpush1.msra.mxu0 %v989
    %1324 = vmatprep.subr.mxu0 %v994
    %1325 = vmatpush1.msra.mxu0 %v993
    %1326 = vmatprep.subr.mxu0 %v998
    %1327 = vmatpush1.msra.mxu0 %v997
    %1328 = vmatprep.subr.mxu0 %v1002
    %1329 = vmatpush1.msra.mxu0 %v1001
    %1330 = vmatprep.subr.mxu0 %v1006
    %1331 = vmatpush1.msra.mxu0 %v1005
    %1332 = vmatprep.subr.mxu0 %v1010
    %1333 = vmatpush1.msra.mxu0 %v1009
    %1334 = vmatprep.subr.mxu0 %v1014
    %1335 = vmatpush1.msra.mxu0 %v1013
    %1336 = vmatprep.subr.mxu0 %v1018
    %1337 = vmatpush1.msra.mxu0 %v1017
    %1338 = vmatprep.subr.mxu0 %v1022
    %1339 = vmatpush1.msra.mxu0 %v1021
    %1340 = vmatprep.subr.mxu0 %v1026
    %1341 = vmatpush1.msra.mxu0 %v1025
    %1342 = vmatprep.subr.mxu0 %v1030
    %1343 = vmatpush1.msra.mxu0 %v1029
    %1344 = vmatprep.subr.mxu0 %v1034
    %1345 = vmatpush1.msra.mxu0 %v1033
    %1346 = vmatprep.subr.mxu0 %v1038
    %1347 = vmatpush1.msra.mxu0 %v1037
    %1348 = vmatprep.subr.mxu0 %v1042
    %1349 = vmatpush1.msra.mxu0 %v1041
    %1350 = vmatprep.subr.mxu0 %v1046
    %1351 = vmatpush1.msra.mxu0 %v1045
    %1352 = vmatprep.subr.mxu0 %v1050
    %1353 = vmatpush1.msra.mxu0 %v1049
    %1354 = vmatprep.subr.mxu0 %v1054
    %1355 = vmatpush1.msra.mxu0 %v1053
    %1356 = vmatprep.subr.mxu0 %v1058
    %1357 = vmatpush1.msra.mxu0 %v1057
    %1358 = vmatprep.mubr.f32.mxu0 %v802
    %1359 = vmatmul.mubr.f32.gmra.mrb[0].mxu0 %v801
    %v1360 = vpop.f32.mrb[0].mxu0
    %v1361 = vadd.f32 %v1290, %v1360
    %v1362 = vpop.f32.mrb[0].mxu0
    %v1363 = vadd.f32 %v1292, %v1362
    %1364 = vdwg.mxu0
    %v1365 = vmax.f32 %v1219, 0.0
    %v1366 = vmax.f32 %v1221, 0.0
    %v1367 = vmax.f32 %v1361, 0.0
    %v1368 = vmax.f32 %v1363, 0.0
    %v1369 = vld [vmem:[%s7] sm:$0xff]
    %v1370 = vld [vmem:[%s7 + $0x8] sm:$0xff]
    %v1371 = vld [vmem:[%s7 + $0x10] sm:$0xff]
    %v1372 = vld [vmem:[%s7 + $0x18] sm:$0xff]
    %v1373 = vld [vmem:[%s7 + $0x20] sm:$0xff]
    %v1374 = vld [vmem:[%s7 + $0x28] sm:$0xff]
    %v1375 = vld [vmem:[%s7 + $0x30] sm:$0xff]
    %v1376 = vld [vmem:[%s7 + $0x38] sm:$0xff]
    %v1377 = vld [vmem:[%s7 + $0x40] sm:$0xff]
    %v1378 = vld [vmem:[%s7 + $0x48] sm:$0xff]
    %v1379 = vld [vmem:[%s7 + $0x50] sm:$0xff]
    %v1380 = vld [vmem:[%s7 + $0x58] sm:$0xff]
    %v1381 = vld [vmem:[%s7 + $0x60] sm:$0xff]
    %v1382 = vld [vmem:[%s7 + $0x68] sm:$0xff]
    %v1383 = vld [vmem:[%s7 + $0x70] sm:$0xff]
    %v1384 = vld [vmem:[%s7 + $0x78] sm:$0xff]
    %v1385 = vld [vmem:[%s7 + $0x80] sm:$0xff]
    %v1386 = vld [vmem:[%s7 + $0x88] sm:$0xff]
    %v1387 = vld [vmem:[%s7 + $0x90] sm:$0xff]
    %v1388 = vld [vmem:[%s7 + $0x98] sm:$0xff]
    %v1389 = vld [vmem:[%s7 + $0xa0] sm:$0xff]
    %v1390 = vld [vmem:[%s7 + $0xa8] sm:$0xff]
    %v1391 = vld [vmem:[%s7 + $0xb0] sm:$0xff]
    %v1392 = vld [vmem:[%s7 + $0xb8] sm:$0xff]
    %v1393 = vld [vmem:[%s7 + $0xc0] sm:$0xff]
    %v1394 = vld [vmem:[%s7 + $0xc8] sm:$0xff]
    %v1395 = vld [vmem:[%s7 + $0xd0] sm:$0xff]
    %v1396 = vld [vmem:[%s7 + $0xd8] sm:$0xff]
    %v1397 = vld [vmem:[%s7 + $0xe0] sm:$0xff]
    %v1398 = vld [vmem:[%s7 + $0xe8] sm:$0xff]
    %v1399 = vld [vmem:[%s7 + $0xf0] sm:$0xff]
    %v1400 = vld [vmem:[%s7 + $0xf8] sm:$0xff]
    %v1401 = vld [vmem:[%s7 + $0x100] sm:$0xff]
    %v1402 = vld [vmem:[%s7 + $0x108] sm:$0xff]
    %v1403 = vld [vmem:[%s7 + $0x110] sm:$0xff]
    %v1404 = vld [vmem:[%s7 + $0x118] sm:$0xff]
    %v1405 = vld [vmem:[%s7 + $0x120] sm:$0xff]
    %v1406 = vld [vmem:[%s7 + $0x128] sm:$0xff]
    %v1407 = vld [vmem:[%s7 + $0x130] sm:$0xff]
    %v1408 = vld [vmem:[%s7 + $0x138] sm:$0xff]
    %v1409 = vld [vmem:[%s7 + $0x140] sm:$0xff]
    %v1410 = vld [vmem:[%s7 + $0x148] sm:$0xff]
    %v1411 = vld [vmem:[%s7 + $0x150] sm:$0xff]
    %v1412 = vld [vmem:[%s7 + $0x158] sm:$0xff]
    %v1413 = vld [vmem:[%s7 + $0x160] sm:$0xff]
    %v1414 = vld [vmem:[%s7 + $0x168] sm:$0xff]
    %v1415 = vld [vmem:[%s7 + $0x170] sm:$0xff]
    %v1416 = vld [vmem:[%s7 + $0x178] sm:$0xff]
    %v1417 = vld [vmem:[%s7 + $0x180] sm:$0xff]
    %v1418 = vld [vmem:[%s7 + $0x188] sm:$0xff]
    %v1419 = vld [vmem:[%s7 + $0x190] sm:$0xff]
    %v1420 = vld [vmem:[%s7 + $0x198] sm:$0xff]
    %v1421 = vld [vmem:[%s7 + $0x1a0] sm:$0xff]
    %v1422 = vld [vmem:[%s7 + $0x1a8] sm:$0xff]
    %v1423 = vld [vmem:[%s7 + $0x1b0] sm:$0xff]
    %v1424 = vld [vmem:[%s7 + $0x1b8] sm:$0xff]
    %v1425 = vld [vmem:[%s7 + $0x1c0] sm:$0xff]
    %v1426 = vld [vmem:[%s7 + $0x1c8] sm:$0xff]
    %v1427 = vld [vmem:[%s7 + $0x1d0] sm:$0xff]
    %v1428 = vld [vmem:[%s7 + $0x1d8] sm:$0xff]
    %v1429 = vld [vmem:[%s7 + $0x1e0] sm:$0xff]
    %v1430 = vld [vmem:[%s7 + $0x1e8] sm:$0xff]
    %v1431 = vld [vmem:[%s7 + $0x1f0] sm:$0xff]
    %v1432 = vld [vmem:[%s7 + $0x1f8] sm:$0xff]
    %v1433 = vld [vmem:[%s8] sm:$0x1]
    %v1435 = vlaneseq
    %v1436 = vshrl.u32 %v1435, 7
    %v1437 = vsub.s32 0, %v1436
    %v1438 = vrot.slane %v1433, %v1437
    %1440 = vmatprep.subr.mxu0 0.0
    %1441 = vmatpush1.msra.mxu0 %v1369
    %1442 = vmatprep.subr.mxu0 0.0
    %1443 = vmatpush1.msra.mxu0 %v1370
    %1444 = vmatprep.subr.mxu0 0.0
    %1445 = vmatpush1.msra.mxu0 %v1371
    %1446 = vmatprep.subr.mxu0 0.0
    %1447 = vmatpush1.msra.mxu0 %v1372
    %1448 = vmatprep.subr.mxu0 0.0
    %1449 = vmatpush1.msra.mxu0 %v1373
    %1450 = vmatprep.subr.mxu0 0.0
    %1451 = vmatpush1.msra.mxu0 %v1374
    %1452 = vmatprep.subr.mxu0 0.0
    %1453 = vmatpush1.msra.mxu0 %v1375
    %1454 = vmatprep.subr.mxu0 0.0
    %1455 = vmatpush1.msra.mxu0 %v1376
    %1456 = vmatprep.subr.mxu0 0.0
    %1457 = vmatpush1.msra.mxu0 %v1377
    %1458 = vmatprep.subr.mxu0 0.0
    %1459 = vmatpush1.msra.mxu0 %v1378
    %1460 = vmatprep.subr.mxu0 0.0
    %1461 = vmatpush1.msra.mxu0 %v1379
    %1462 = vmatprep.subr.mxu0 0.0
    %1463 = vmatpush1.msra.mxu0 %v1380
    %1464 = vmatprep.subr.mxu0 0.0
    %1465 = vmatpush1.msra.mxu0 %v1381
    %1466 = vmatprep.subr.mxu0 0.0
    %1467 = vmatpush1.msra.mxu0 %v1382
    %1468 = vmatprep.subr.mxu0 0.0
    %1469 = vmatpush1.msra.mxu0 %v1383
    %1470 = vmatprep.subr.mxu0 0.0
    %1471 = vmatpush1.msra.mxu0 %v1384
    %1472 = vmatprep.subr.mxu0 0.0
    %1473 = vmatpush1.msra.mxu0 %v1385
    %1474 = vmatprep.subr.mxu0 0.0
    %1475 = vmatpush1.msra.mxu0 %v1386
    %1476 = vmatprep.subr.mxu0 0.0
    %1477 = vmatpush1.msra.mxu0 %v1387
    %1478 = vmatprep.subr.mxu0 0.0
    %1479 = vmatpush1.msra.mxu0 %v1388
    %1480 = vmatprep.subr.mxu0 0.0
    %1481 = vmatpush1.msra.mxu0 %v1389
    %1482 = vmatprep.subr.mxu0 0.0
    %1483 = vmatpush1.msra.mxu0 %v1390
    %1484 = vmatprep.subr.mxu0 0.0
    %1485 = vmatpush1.msra.mxu0 %v1391
    %1486 = vmatprep.subr.mxu0 0.0
    %1487 = vmatpush1.msra.mxu0 %v1392
    %1488 = vmatprep.subr.mxu0 0.0
    %1489 = vmatpush1.msra.mxu0 %v1393
    %1490 = vmatprep.subr.mxu0 0.0
    %1491 = vmatpush1.msra.mxu0 %v1394
    %1492 = vmatprep.subr.mxu0 0.0
    %1493 = vmatpush1.msra.mxu0 %v1395
    %1494 = vmatprep.subr.mxu0 0.0
    %1495 = vmatpush1.msra.mxu0 %v1396
    %1496 = vmatprep.subr.mxu0 0.0
    %1497 = vmatpush1.msra.mxu0 %v1397
    %1498 = vmatprep.subr.mxu0 0.0
    %1499 = vmatpush1.msra.mxu0 %v1398
    %1500 = vmatprep.subr.mxu0 0.0
    %1501 = vmatpush1.msra.mxu0 %v1399
    %1502 = vmatprep.subr.mxu0 0.0
    %1503 = vmatpush1.msra.mxu0 %v1400
    %1504 = vmatprep.mubr.f32.mxu0 %v1366
    %1505 = vmatmul.mubr.f32.gmra.mrb[0].mxu0 %v1365
    %v1506 = vpop.f32.mrb[0].mxu0
    %v1507 = vadd.f32 %v1438, %v1506
    %v1508 = vpop.f32.mrb[0].mxu0
    %1509 = vdwg.mxu0
    %1510 = vmatprep.subr.mxu0 0.0
    %1511 = vmatpush1.msra.mxu0 %v1401
    %1512 = vmatprep.subr.mxu0 0.0
    %1513 = vmatpush1.msra.mxu0 %v1402
    %1514 = vmatprep.subr.mxu0 0.0
    %1515 = vmatpush1.msra.mxu0 %v1403
    %1516 = vmatprep.subr.mxu0 0.0
    %1517 = vmatpush1.msra.mxu0 %v1404
    %1518 = vmatprep.subr.mxu0 0.0
    %1519 = vmatpush1.msra.mxu0 %v1405
    %1520 = vmatprep.subr.mxu0 0.0
    %1521 = vmatpush1.msra.mxu0 %v1406
    %1522 = vmatprep.subr.mxu0 0.0
    %1523 = vmatpush1.msra.mxu0 %v1407
    %1524 = vmatprep.subr.mxu0 0.0
    %1525 = vmatpush1.msra.mxu0 %v1408
    %1526 = vmatprep.subr.mxu0 0.0
    %1527 = vmatpush1.msra.mxu0 %v1409
    %1528 = vmatprep.subr.mxu0 0.0
    %1529 = vmatpush1.msra.mxu0 %v1410
    %1530 = vmatprep.subr.mxu0 0.0
    %1531 = vmatpush1.msra.mxu0 %v1411
    %1532 = vmatprep.subr.mxu0 0.0
    %1533 = vmatpush1.msra.mxu0 %v1412
    %1534 = vmatprep.subr.mxu0 0.0
    %1535 = vmatpush1.msra.mxu0 %v1413
    %1536 = vmatprep.subr.mxu0 0.0
    %1537 = vmatpush1.msra.mxu0 %v1414
    %1538 = vmatprep.subr.mxu0 0.0
    %1539 = vmatpush1.msra.mxu0 %v1415
    %1540 = vmatprep.subr.mxu0 0.0
    %1541 = vmatpush1.msra.mxu0 %v1416
    %1542 = vmatprep.subr.mxu0 0.0
    %1543 = vmatpush1.msra.mxu0 %v1417
    %1544 = vmatprep.subr.mxu0 0.0
    %1545 = vmatpush1.msra.mxu0 %v1418
    %1546 = vmatprep.subr.mxu0 0.0
    %1547 = vmatpush1.msra.mxu0 %v1419
    %1548 = vmatprep.subr.mxu0 0.0
    %1549 = vmatpush1.msra.mxu0 %v1420
    %1550 = vmatprep.subr.mxu0 0.0
    %1551 = vmatpush1.msra.mxu0 %v1421
    %1552 = vmatprep.subr.mxu0 0.0
    %1553 = vmatpush1.msra.mxu0 %v1422
    %1554 = vmatprep.subr.mxu0 0.0
    %1555 = vmatpush1.msra.mxu0 %v1423
    %1556 = vmatprep.subr.mxu0 0.0
    %1557 = vmatpush1.msra.mxu0 %v1424
    %1558 = vmatprep.subr.mxu0 0.0
    %1559 = vmatpush1.msra.mxu0 %v1425
    %1560 = vmatprep.subr.mxu0 0.0
    %1561 = vmatpush1.msra.mxu0 %v1426
    %1562 = vmatprep.subr.mxu0 0.0
    %1563 = vmatpush1.msra.mxu0 %v1427
    %1564 = vmatprep.subr.mxu0 0.0
    %1565 = vmatpush1.msra.mxu0 %v1428
    %1566 = vmatprep.subr.mxu0 0.0
    %1567 = vmatpush1.msra.mxu0 %v1429
    %1568 = vmatprep.subr.mxu0 0.0
    %1569 = vmatpush1.msra.mxu0 %v1430
    %1570 = vmatprep.subr.mxu0 0.0
    %1571 = vmatpush1.msra.mxu0 %v1431
    %1572 = vmatprep.subr.mxu0 0.0
    %1573 = vmatpush1.msra.mxu0 %v1432
    %1574 = vmatprep.mubr.f32.mxu0 %v1368
    %1575 = vmatmul.mubr.f32.gmra.mrb[0].mxu0 %v1367
    %v1576 = vpop.f32.mrb[0].mxu0
    %v1577 = vadd.f32 %v1507, %v1576
    %v1578 = vpop.f32.mrb[0].mxu0
    %1579 = vdwg.mxu0
    %1580 = vst [vmem:[%s9] sm:$0xff] %v1577
    // Predicated region
    $region46: #{simple_net_forward.1} parent=1 // pred_check
      _
    $region47: #{simple_net_forward.1} parent=1 // pred_check_branch
      %1582 = sbr.rel (0) target = $region49
    $region48: #{simple_net_forward.1} parent=1 // pred_region
      _
    $region49: #{simple_net_forward.1} parent=1 // pred_fallthru
      _
    // Predicated region
    $region50: #{simple_net_forward.1} parent=1 // pred_check
      _
    $region51: #{simple_net_forward.1} parent=1 // pred_check_branch
      %1584 = sbr.rel (0) target = $region53
    $region52: #{simple_net_forward.1} parent=1 // pred_region
      _
    $region53: #{simple_net_forward.1} parent=1 // pred_fallthru
      _
    %1585 = vsyncpa [#allocation3], 1
    %1586 = vsyncpa [#allocation5], 1

</llo_original>
